<compile_context>
chip_gen: v6e
topology: v6e:2x2x1
jax: 0.10.0
libtpu: 0.0.40
codegen_flags: <defaults>
</compile_context>

<pallas_src>
import math

import jax
import jax.numpy as jnp
from jax.experimental import pallas as pl
from jax.experimental.pallas import tpu as pltpu

# ----- synthetic GraphDataset / flags_obj configuration -----
NUM_USERS = 24
NUM_ITEMS = 40
N_TOTAL = NUM_USERS + NUM_ITEMS            # 64
EMBED_DIM = 16
NUM_COMMUNITY = 8
N_LAYERS = 2
WEIGHT_DECAY = 1e-4
BATCH = 8                                  # multiple of 8 keeps all row slices sublane-aligned

EPS_NORM = 1e-12                           # torch F.normalize default eps
EPS_PDIST = 1e-6                           # torch nn.PairwiseDistance default eps

# combined gather-table column layout (built in-kernel): [ emb | structure | pref_merge ]
C_EMB_LO, C_EMB_HI = 0, EMBED_DIM                          # 0:16
C_STR_LO, C_STR_HI = C_EMB_HI, C_EMB_HI + NUM_COMMUNITY    # 16:24
C_PRF_LO, C_PRF_HI = C_STR_HI, C_STR_HI + NUM_COMMUNITY    # 24:32
COMB_COLS = C_PRF_HI                                       # 32
SEL_ROWS = 6 * BATCH   # row blocks: u | adj | int_mask | dist_mask | int_wrap | dist_wrap


def _l2_normalize(x):
    # x / max(||x||, eps)  ==  x * rsqrt(max(||x||^2, eps^2))
    ss = jnp.sum(x * x, axis=-1, keepdims=True)
    return x * jax.lax.rsqrt(jnp.maximum(ss, EPS_NORM * EPS_NORM))


def _sigmoid(x):
    # safe for large |x| in f32 (exp overflow -> inf -> 1/inf = 0)
    return 1.0 / (1.0 + jnp.exp(-x))


def _neg_log_sigmoid(x):
    # -log(sigmoid(x)) = softplus(-x), numerically stable form
    return jnp.maximum(-x, 0.0) + jnp.log(1.0 + jnp.exp(-jnp.abs(x)))


# --------------------------------------------------------------------------
# Fused kernel: LightGCN propagation (once) + single gather matmul + full loss
# --------------------------------------------------------------------------
def fused_kernel(graph_ref, emb_struct_ref, pref0_ref, sel_ref, out_ref, comb_ref):
    k = pl.program_id(0)
    B = BATCH

    # ---- once per call: propagation -> combined gather table in VMEM scratch ----
    @pl.when(k == 0)
    def _():
        # TODO(synk): dataset.origin_Graph is torch.sparse (+ optional training-time
        # dropout); a dense degree-normalized stand-in is propagated on the MXU.
        g = graph_ref[...]                                   # (N, N)
        p = _l2_normalize(pref0_ref[...])                    # (N, 8)
        acc = p
        for _ in range(N_LAYERS):
            p = _l2_normalize(jnp.dot(g, p, preferred_element_type=jnp.float32))
            acc = acc + p
        pref_merge = acc * (1.0 / float(N_LAYERS + 1))
        # TODO(synk): kept f32 for PyTorch parity; cast both matmul operands to bf16
        # (preferred_element_type=f32) when scaling up on v6e/v7x to avoid the
        # multi-pass f32 MXU path.  Also tile the graph with a BlockSpec grid before
        # N_TOTAL grows past the VMEM residency ceiling (esp. v7x 64 MiB).
        comb_ref[...] = jnp.concatenate([emb_struct_ref[...], pref_merge], axis=1)

    # ---- single fused gather matmul: (6B, N) x (N, 32) on the MXU ----
    gath = jnp.dot(sel_ref[...], comb_ref[...], preferred_element_type=jnp.float32)
    # row blocks (B rows each): u | adj | int_mask | dist_mask | int_wrap | dist_wrap
    u_blk = gath[0:B]

    # ---- regularization ----
    emb4 = gath[0:4 * B, C_EMB_LO:C_EMB_HI]                  # u, adj, int(mask), dist(mask) embeddings
    reg1 = 0.5 * jnp.sum(emb4 * emb4) / float(B)
    pref0 = pref0_ref[...]
    row_ids = jax.lax.broadcasted_iota(jnp.int32, (N_TOTAL, 1), 0)
    reg_w = jnp.where(row_ids < NUM_USERS, 1.0 / float(NUM_USERS), 1.0 / float(NUM_ITEMS))
    reg3 = 0.5 * jnp.sum(reg_w * pref0 * pref0)
    regular_loss = WEIGHT_DECAY * (reg1 + reg3)

    # ---- packed pair dot-products (embedding + merged preference) vs. user rows ----
    u3 = jnp.concatenate([u_blk, u_blk, u_blk], axis=0)      # (3B, 32)
    prod = u3 * gath[B:4 * B]                                # rows: adj, int_mask, dist_mask
    emb_dots = jnp.sum(prod[:, C_EMB_LO:C_EMB_HI], axis=-1, keepdims=True)   # (3B, 1)
    prf_dots = jnp.sum(prod[:, C_PRF_LO:C_PRF_HI], axis=-1, keepdims=True)   # (3B, 1)
    s_pos, s_int, s_dist = emb_dots[0:B], emb_dots[B:2 * B], emb_dots[2 * B:3 * B]
    dp_adj, dp_int, dp_dist = prf_dots[0:B], prf_dots[B:2 * B], prf_dots[2 * B:3 * B]

    # ---- packed structure normalization + pairwise distances ----
    st4 = jnp.concatenate([gath[0:2 * B, C_STR_LO:C_STR_HI],        # u, adj
                           gath[4 * B:6 * B, C_STR_LO:C_STR_HI]],   # int_wrap, dist_wrap
                          axis=0)                                   # (4B, 8)
    n4 = _l2_normalize(st4)
    um = n4[0:B]
    um3 = jnp.concatenate([um, um, um], axis=0)                     # (3B, 8)
    diff = um3 - n4[B:4 * B] + EPS_PDIST
    pdist = jnp.sqrt(jnp.sum(diff * diff, axis=-1, keepdims=True))  # (3B, 1)
    gs3 = (2.0 - pdist) * 0.5
    gs_adj, gs_int, gs_dist = gs3[0:B], gs3[B:2 * B], gs3[2 * B:3 * B]

    # ---- packed sigmoid for intermediate/distant preference gammas ----
    gp2 = _sigmoid(jnp.concatenate([dp_int, dp_dist], axis=0))      # (2B, 1)
    gp_int, gp_dist = gp2[0:B], gp2[B:2 * B]

    # ---- weighted negative score (neg_embedding never materialized) ----
    ig = 0.5 * (gp_int + gs_int)
    dg = 0.5 * (gp_dist + gs_dist)
    inv = pl.reciprocal(ig + dg, approx=True)
    s_neg = (ig * inv) * s_int + (dg * inv) * s_dist

    # ---- packed -log_sigmoid chain + weighted mean -> scalar loss ----
    z = jnp.concatenate([dp_adj,                 # gamma_preference_loss term
                         gs_int - gs_dist,       # gamma_structure_loss1
                         gs_adj - gs_int,        # gamma_structure_loss2
                         s_pos - s_neg],         # bce_loss
                        axis=1)                  # (B, 4)
    nls = _neg_log_sigmoid(z)
    col = jax.lax.broadcasted_iota(jnp.int32, (B, 4), 1)
    w = jnp.where(col == 3, 1.0, jnp.where(col == 0, 0.01, 0.005)) * (1.0 / float(B))
    out_ref[k, 0] = jnp.sum(nls * w) + regular_loss


# --------------------------------------------------------------------------
# Host-side (jitted) index -> one-hot selection slab construction
# --------------------------------------------------------------------------
def _wrap_neg(idx, n):
    # torch fancy indexing: negative index wraps from the end
    return jnp.where(idx < 0, idx + n, idx)


def _build_selection(users, adjacent_items, intermediate_items, distant_items):
    """(K, B) int32 index vectors -> (K*6B, N_TOTAL) f32 one-hot selection slab."""
    u_rows = _wrap_neg(users, NUM_USERS)
    a_rows = NUM_USERS + _wrap_neg(adjacent_items, NUM_ITEMS)
    i_wrap = NUM_USERS + _wrap_neg(intermediate_items, NUM_ITEMS)
    d_wrap = NUM_USERS + _wrap_neg(distant_items, NUM_ITEMS)
    # get_multi_hop_vector: index == -1  ->  zero row (sentinel matches no column)
    i_mask = jnp.where(intermediate_items == -1, -1, i_wrap)
    d_mask = jnp.where(distant_items == -1, -1, d_wrap)
    rows = jnp.stack([u_rows, a_rows, i_mask, d_mask, i_wrap, d_wrap], axis=1)  # (K, 6, B)
    rows = rows.reshape(-1, 1)                                                  # (K*6B, 1)
    cols = jnp.arange(N_TOTAL, dtype=jnp.int32)[None, :]
    return (rows == cols).astype(jnp.float32)


# --------------------------------------------------------------------------
# Wrappers
# --------------------------------------------------------------------------
@jax.jit
def multi_fawmf_forward_batched(params, graph, users, adjacent_items,
                                intermediate_items, distant_items):
    """Index args have shape (K, BATCH); returns (K,) losses (one per mini-batch)."""
    num_batches = users.shape[0]

    emb_all = jnp.concatenate([params["user_embedding"], params["item_embedding"]], axis=0)
    struct_all = jnp.concatenate([params["user_structure"], params["item_structure"]], axis=0)
    pref0 = jnp.concatenate([params["user_preference"], params["item_preference"]],
                            axis=0).astype(jnp.float32)                       # (N, 8)
    emb_struct = jnp.concatenate([emb_all, struct_all], axis=1).astype(jnp.float32)  # (N, 24)

    sel = _build_selection(users.astype(jnp.int32), adjacent_items.astype(jnp.int32),
                           intermediate_items.astype(jnp.int32),
                           distant_items.astype(jnp.int32))                    # (K*6B, N)

    losses = pl.pallas_call(
        fused_kernel,
        grid=(num_batches,),
        out_shape=jax.ShapeDtypeStruct((num_batches, 1), jnp.float32),
        in_specs=[
            pl.BlockSpec((N_TOTAL, N_TOTAL), lambda k: (0, 0)),        # graph (resident)
            pl.BlockSpec((N_TOTAL, C_STR_HI), lambda k: (0, 0)),       # [emb|struct] (resident)
            pl.BlockSpec((N_TOTAL, NUM_COMMUNITY), lambda k: (0, 0)),  # raw preference (resident)
            pl.BlockSpec((SEL_ROWS, N_TOTAL), lambda k: (k, 0)),       # per-minibatch selection
        ],
        out_specs=pl.BlockSpec(memory_space=pltpu.MemorySpace.SMEM),
        scratch_shapes=[pltpu.VMEM((N_TOTAL, COMB_COLS), jnp.float32)],
        compiler_params=pltpu.CompilerParams(dimension_semantics=("arbitrary",)),
    )(graph.astype(jnp.float32), emb_struct, pref0, sel)
    return losses[:, 0]


def multi_fawmf_forward(params, graph, users, adjacent_items,
                        intermediate_items, distant_items):
    """Module-equivalent single-batch forward: returns the scalar loss."""
    losses = multi_fawmf_forward_batched(
        params, graph, users[None, :], adjacent_items[None, :],
        intermediate_items[None, :], distant_items[None, :])
    return losses[0]


# --------------------------------------------------------------------------
# Parameter / data construction (plain JAX)
# --------------------------------------------------------------------------
def init_params(key):
    ks = jax.random.split(key, 6)
    stdv_e = 1.0 / math.sqrt(EMBED_DIM)
    stdv_c = 1.0 / math.sqrt(NUM_COMMUNITY)
    uni = lambda k, shape, lo, hi: jax.random.uniform(
        k, shape, jnp.float32, minval=lo, maxval=hi)
    return {
        "user_embedding": uni(ks[0], (NUM_USERS, EMBED_DIM), -stdv_e, stdv_e),
        "item_embedding": uni(ks[1], (NUM_ITEMS, EMBED_DIM), -stdv_e, stdv_e),
        "user_preference": uni(ks[2], (NUM_USERS, NUM_COMMUNITY), -stdv_c, stdv_c),
        "item_preference": uni(ks[3], (NUM_ITEMS, NUM_COMMUNITY), -stdv_c, stdv_c),
        "user_structure": uni(ks[4], (NUM_USERS, NUM_COMMUNITY), -stdv_c, stdv_c),
        "item_structure": uni(ks[5], (NUM_ITEMS, NUM_COMMUNITY), -stdv_c, stdv_c),
        # TODO(synk): w1/w2 user/item exist in __init__ but are unused in forward.
    }


def make_graph(key):
    # symmetric, degree-normalized user-item bipartite graph (dense stand-in
    # for dataset.origin_Graph)
    a_ui = (jax.random.uniform(key, (NUM_USERS, NUM_ITEMS)) < 0.3).astype(jnp.float32)
    top = jnp.concatenate([jnp.zeros((NUM_USERS, NUM_USERS)), a_ui], axis=1)
    bot = jnp.concatenate([a_ui.T, jnp.zeros((NUM_ITEMS, NUM_ITEMS))], axis=1)
    adj = jnp.concatenate([top, bot], axis=0)
    deg = jnp.sum(adj, axis=-1)
    d_inv_sqrt = jnp.where(deg > 0, 1.0 / jnp.sqrt(deg), 0.0)
    return (d_inv_sqrt[:, None] * adj * d_inv_sqrt[None, :]).astype(jnp.float32)


if __name__ == "__main__":
    root = jax.random.PRNGKey(0)
    k_params, k_graph, k_u, k_a, k_i, k_d = jax.random.split(root, 6)

    params = init_params(k_params)
    graph = make_graph(k_graph)

    K = 4   # mini-batches per pallas_call (amortizes launch/DMA overhead)
    users = jax.random.randint(k_u, (K, BATCH), 0, NUM_USERS, dtype=jnp.int32)
    adjacent_items = jax.random.randint(k_a, (K, BATCH), 0, NUM_ITEMS, dtype=jnp.int32)
    intermediate_items = jax.random.randint(k_i, (K, BATCH), 0, NUM_ITEMS, dtype=jnp.int32)
    distant_items = jax.random.randint(k_d, (K, BATCH), 0, NUM_ITEMS, dtype=jnp.int32)
    # exercise the -1 (missing multi-hop item) path
    intermediate_items = intermediate_items.at[0, 1].set(-1)
    distant_items = distant_items.at[2, 3].set(-1)

    losses = multi_fawmf_forward_batched(params, graph, users, adjacent_items,
                                         intermediate_items, distant_items)
    losses = jax.block_until_ready(losses)
    assert losses.shape == (K,)
    assert bool(jnp.all(jnp.isfinite(losses))), "losses are not finite"

    # single-batch (module-equivalent) interface should agree with batch 0
    loss0 = multi_fawmf_forward(params, graph, users[0], adjacent_items[0],
                                intermediate_items[0], distant_items[0])
    loss0 = jax.block_until_ready(loss0)
    assert bool(jnp.isfinite(loss0)), "loss is not finite"
    assert bool(jnp.allclose(loss0, losses[0], rtol=1e-5, atol=1e-5))

    print("KERNEL_OK")
</pallas_src>

<mosaic_0001>
module attributes {stable_mosaic.version = 11 : i64} {
  func.func @fused_kernel(%arg0: i32, %arg1: memref<64x64xf32, #tpu.memory_space<vmem>>, %arg2: memref<64x24xf32, #tpu.memory_space<vmem>>, %arg3: memref<64x8xf32, #tpu.memory_space<vmem>>, %arg4: memref<48x64xf32, #tpu.memory_space<vmem>>, %arg5: memref<4x1xf32, #tpu.memory_space<smem>>, %arg6: memref<64x32xf32, #tpu.memory_space<vmem>>) attributes {dimension_semantics = [#tpu.dimension_semantics<arbitrary>], iteration_bounds = array<i64: 4>, scalar_prefetch = 0 : i64, scratch_operands = 1 : i64, tpu.core_type = #tpu.core_type<tc>, window_params = [{pipeline_mode = #tpu.pipeline_mode<synchronous>, transform_indices = @transform_0, window_bounds = array<i64: 64, 64>}, {pipeline_mode = #tpu.pipeline_mode<synchronous>, transform_indices = @transform_1, window_bounds = array<i64: 64, 24>}, {pipeline_mode = #tpu.pipeline_mode<synchronous>, transform_indices = @transform_2, window_bounds = array<i64: 64, 8>}, {transform_indices = @transform_3, window_bounds = array<i64: 48, 64>}, {transform_indices = @transform_4, window_bounds = array<i64: 4, 1>}]} {
    %c0_i32 = arith.constant 0 : i32
    %0 = arith.cmpi eq, %arg0, %c0_i32 : i32
    %1 = arith.extui %0 : i1 to i32
    %c0_i32_0 = arith.constant 0 : i32
    %2 = arith.cmpi ne, %1, %c0_i32_0 : i32
    scf.if %2 {
      %c0_38 = arith.constant 0 : index
      %c0_39 = arith.constant 0 : index
      %134 = vector.load %arg1[%c0_38, %c0_39] : memref<64x64xf32, #tpu.memory_space<vmem>>, vector<64x64xf32>
      %c0_40 = arith.constant 0 : index
      %c0_41 = arith.constant 0 : index
      %135 = vector.load %arg3[%c0_40, %c0_41] : memref<64x8xf32, #tpu.memory_space<vmem>>, vector<64x8xf32>
      %136 = arith.mulf %135, %135 : vector<64x8xf32>
      %cst_42 = arith.constant dense<0.000000e+00> : vector<64xf32>
      %137 = vector.multi_reduction <add>, %136, %cst_42 [1] : vector<64x8xf32> to vector<64xf32>
      %138 = vector.shape_cast %137 : vector<64xf32> to vector<64x1xf32>
      %cst_43 = arith.constant 1.000000e-24 : f32
      %139 = vector.broadcast %cst_43 : f32 to vector<64x1xf32>
      %140 = arith.maximumf %138, %139 : vector<64x1xf32>
      %141 = math.rsqrt %140 : vector<64x1xf32>
      %142 = vector.broadcast %141 : vector<64x1xf32> to vector<64x8xf32>
      %143 = arith.mulf %135, %142 : vector<64x8xf32>
      %cst_44 = arith.constant dense<0.000000e+00> : vector<64x8xf32>
      %144 = tpu.matmul %134, %143, %cst_44 {dimension_numbers = #tpu.dot_dimension_numbers<[1], [0], [0], [1], [0, 0, 1, 1], [], []>} : vector<64x64xf32>, vector<64x8xf32>, vector<64x8xf32> -> vector<64x8xf32>
      %145 = arith.mulf %144, %144 : vector<64x8xf32>
      %cst_45 = arith.constant dense<0.000000e+00> : vector<64xf32>
      %146 = vector.multi_reduction <add>, %145, %cst_45 [1] : vector<64x8xf32> to vector<64xf32>
      %147 = vector.shape_cast %146 : vector<64xf32> to vector<64x1xf32>
      %cst_46 = arith.constant 1.000000e-24 : f32
      %148 = vector.broadcast %cst_46 : f32 to vector<64x1xf32>
      %149 = arith.maximumf %147, %148 : vector<64x1xf32>
      %150 = math.rsqrt %149 : vector<64x1xf32>
      %151 = vector.broadcast %150 : vector<64x1xf32> to vector<64x8xf32>
      %152 = arith.mulf %144, %151 : vector<64x8xf32>
      %153 = arith.addf %143, %152 : vector<64x8xf32>
      %cst_47 = arith.constant dense<0.000000e+00> : vector<64x8xf32>
      %154 = tpu.matmul %134, %152, %cst_47 {dimension_numbers = #tpu.dot_dimension_numbers<[1], [0], [0], [1], [0, 0, 1, 1], [], []>} : vector<64x64xf32>, vector<64x8xf32>, vector<64x8xf32> -> vector<64x8xf32>
      %155 = arith.mulf %154, %154 : vector<64x8xf32>
      %cst_48 = arith.constant dense<0.000000e+00> : vector<64xf32>
      %156 = vector.multi_reduction <add>, %155, %cst_48 [1] : vector<64x8xf32> to vector<64xf32>
      %157 = vector.shape_cast %156 : vector<64xf32> to vector<64x1xf32>
      %cst_49 = arith.constant 1.000000e-24 : f32
      %158 = vector.broadcast %cst_49 : f32 to vector<64x1xf32>
      %159 = arith.maximumf %157, %158 : vector<64x1xf32>
      %160 = math.rsqrt %159 : vector<64x1xf32>
      %161 = vector.broadcast %160 : vector<64x1xf32> to vector<64x8xf32>
      %162 = arith.mulf %154, %161 : vector<64x8xf32>
      %163 = arith.addf %153, %162 : vector<64x8xf32>
      %cst_50 = arith.constant 0.333333343 : f32
      %164 = vector.broadcast %cst_50 : f32 to vector<64x8xf32>
      %165 = arith.mulf %163, %164 : vector<64x8xf32>
      %c0_51 = arith.constant 0 : index
      %c0_52 = arith.constant 0 : index
      %166 = vector.load %arg2[%c0_51, %c0_52] : memref<64x24xf32, #tpu.memory_space<vmem>>, vector<64x24xf32>
      %167 = tpu.concatenate %166, %165 in 1 : vector<64x24xf32>, vector<64x8xf32> -> vector<64x32xf32>
      %c0_53 = arith.constant 0 : index
      %c0_54 = arith.constant 0 : index
      %168 = vector.load %arg6[%c0_53, %c0_54] : memref<64x32xf32, #tpu.memory_space<vmem>>, vector<64x32xf32>
      tpu.vector_store %arg6[%c0_53, %c0_54], %167 {strides = array<i32>} : memref<64x32xf32, #tpu.memory_space<vmem>>, vector<64x32xf32>,
    } else {
    }
    %c0 = arith.constant 0 : index
    %c0_1 = arith.constant 0 : index
    %3 = vector.load %arg4[%c0, %c0_1] : memref<48x64xf32, #tpu.memory_space<vmem>>, vector<48x64xf32>
    %c0_2 = arith.constant 0 : index
    %c0_3 = arith.constant 0 : index
    %4 = vector.load %arg6[%c0_2, %c0_3] : memref<64x32xf32, #tpu.memory_space<vmem>>, vector<64x32xf32>
    %cst = arith.constant dense<0.000000e+00> : vector<48x32xf32>
    %5 = tpu.matmul %3, %4, %cst {dimension_numbers = #tpu.dot_dimension_numbers<[1], [0], [0], [1], [0, 0, 1, 1], [], []>} : vector<48x64xf32>, vector<64x32xf32>, vector<48x32xf32> -> vector<48x32xf32>
    %6 = vector.extract_strided_slice %5 {offsets = [0, 0], sizes = [8, 32], strides = [1, 1]} : vector<48x32xf32> to vector<8x32xf32>
    %7 = vector.extract_strided_slice %5 {offsets = [0, 0], sizes = [32, 16], strides = [1, 1]} : vector<48x32xf32> to vector<32x16xf32>
    %8 = arith.mulf %7, %7 : vector<32x16xf32>
    %9 = vector.shape_cast %8 : vector<32x16xf32> to vector<1x32x16xf32>
    %cst_4 = arith.constant dense<0.000000e+00> : vector<1xf32>
    %10 = vector.multi_reduction <add>, %9, %cst_4 [1, 2] : vector<1x32x16xf32> to vector<1xf32>
    %11 = vector.shape_cast %10 : vector<1xf32> to vector<1x1x1xf32>
    %12 = vector.extract %11[0, 0, 0] : f32 from vector<1x1x1xf32>
    %cst_5 = arith.constant 5.000000e-01 : f32
    %13 = arith.mulf %cst_5, %12 : f32
    %cst_6 = arith.constant 8.000000e+00 : f32
    %14 = arith.divf %13, %cst_6 : f32
    %c0_7 = arith.constant 0 : index
    %c0_8 = arith.constant 0 : index
    %15 = vector.load %arg3[%c0_7, %c0_8] : memref<64x8xf32, #tpu.memory_space<vmem>>, vector<64x8xf32>
    %16 = tpu.iota {dimensions = array<i32: 0>} : vector<64x1xi32>
    %c24_i32 = arith.constant 24 : i32
    %17 = vector.broadcast %c24_i32 : i32 to vector<64x1xi32>
    %18 = arith.cmpi slt, %16, %17 : vector<64x1xi32>
    %cst_9 = arith.constant 0.0416666679 : f32
    %cst_10 = arith.constant 2.500000e-02 : f32
    %19 = vector.broadcast %cst_9 : f32 to vector<64x1xf32>
    %20 = vector.broadcast %cst_10 : f32 to vector<64x1xf32>
    %21 = arith.select %18, %19, %20 : vector<64x1xi1>, vector<64x1xf32>
    %22 = vector.broadcast %21 : vector<64x1xf32> to vector<64x8xf32>
    %23 = arith.mulf %22, %15 : vector<64x8xf32>
    %24 = arith.mulf %23, %15 : vector<64x8xf32>
    %25 = vector.shape_cast %24 : vector<64x8xf32> to vector<1x64x8xf32>
    %cst_11 = arith.constant dense<0.000000e+00> : vector<1xf32>
    %26 = vector.multi_reduction <add>, %25, %cst_11 [1, 2] : vector<1x64x8xf32> to vector<1xf32>
    %27 = vector.shape_cast %26 : vector<1xf32> to vector<1x1x1xf32>
    %28 = vector.extract %27[0, 0, 0] : f32 from vector<1x1x1xf32>
    %cst_12 = arith.constant 5.000000e-01 : f32
    %29 = arith.mulf %cst_12, %28 : f32
    %30 = arith.addf %14, %29 : f32
    %cst_13 = arith.constant 9.99999974E-5 : f32
    %31 = arith.mulf %cst_13, %30 : f32
    %32 = tpu.concatenate %6, %6, %6 in 0 : vector<8x32xf32>, vector<8x32xf32>, vector<8x32xf32> -> vector<24x32xf32>
    %33 = vector.extract_strided_slice %5 {offsets = [8, 0], sizes = [24, 32], strides = [1, 1]} : vector<48x32xf32> to vector<24x32xf32>
    %34 = arith.mulf %32, %33 : vector<24x32xf32>
    %35 = vector.extract_strided_slice %34 {offsets = [0, 0], sizes = [24, 16], strides = [1, 1]} : vector<24x32xf32> to vector<24x16xf32>
    %cst_14 = arith.constant dense<0.000000e+00> : vector<24xf32>
    %36 = vector.multi_reduction <add>, %35, %cst_14 [1] : vector<24x16xf32> to vector<24xf32>
    %37 = vector.shape_cast %36 : vector<24xf32> to vector<24x1xf32>
    %38 = vector.extract_strided_slice %34 {offsets = [0, 24], sizes = [24, 8], strides = [1, 1]} : vector<24x32xf32> to vector<24x8xf32>
    %cst_15 = arith.constant dense<0.000000e+00> : vector<24xf32>
    %39 = vector.multi_reduction <add>, %38, %cst_15 [1] : vector<24x8xf32> to vector<24xf32>
    %40 = vector.shape_cast %39 : vector<24xf32> to vector<24x1xf32>
    %41 = vector.extract_strided_slice %37 {offsets = [0, 0], sizes = [8, 1], strides = [1, 1]} : vector<24x1xf32> to vector<8x1xf32>
    %42 = vector.extract_strided_slice %37 {offsets = [8, 0], sizes = [8, 1], strides = [1, 1]} : vector<24x1xf32> to vector<8x1xf32>
    %43 = vector.extract_strided_slice %37 {offsets = [16, 0], sizes = [8, 1], strides = [1, 1]} : vector<24x1xf32> to vector<8x1xf32>
    %44 = vector.extract_strided_slice %40 {offsets = [0, 0], sizes = [8, 1], strides = [1, 1]} : vector<24x1xf32> to vector<8x1xf32>
    %45 = vector.extract_strided_slice %40 {offsets = [8, 0], sizes = [8, 1], strides = [1, 1]} : vector<24x1xf32> to vector<8x1xf32>
    %46 = vector.extract_strided_slice %40 {offsets = [16, 0], sizes = [8, 1], strides = [1, 1]} : vector<24x1xf32> to vector<8x1xf32>
    %47 = vector.extract_strided_slice %5 {offsets = [0, 16], sizes = [16, 8], strides = [1, 1]} : vector<48x32xf32> to vector<16x8xf32>
    %48 = vector.extract_strided_slice %5 {offsets = [32, 16], sizes = [16, 8], strides = [1, 1]} : vector<48x32xf32> to vector<16x8xf32>
    %49 = tpu.concatenate %47, %48 in 0 : vector<16x8xf32>, vector<16x8xf32> -> vector<32x8xf32>
    %50 = arith.mulf %49, %49 : vector<32x8xf32>
    %cst_16 = arith.constant dense<0.000000e+00> : vector<32xf32>
    %51 = vector.multi_reduction <add>, %50, %cst_16 [1] : vector<32x8xf32> to vector<32xf32>
    %52 = vector.shape_cast %51 : vector<32xf32> to vector<32x1xf32>
    %cst_17 = arith.constant 1.000000e-24 : f32
    %53 = vector.broadcast %cst_17 : f32 to vector<32x1xf32>
    %54 = arith.maximumf %52, %53 : vector<32x1xf32>
    %55 = math.rsqrt %54 : vector<32x1xf32>
    %56 = vector.broadcast %55 : vector<32x1xf32> to vector<32x8xf32>
    %57 = arith.mulf %49, %56 : vector<32x8xf32>
    %58 = vector.extract_strided_slice %57 {offsets = [0, 0], sizes = [8, 8], strides = [1, 1]} : vector<32x8xf32> to vector<8x8xf32>
    %59 = tpu.concatenate %58, %58, %58 in 0 : vector<8x8xf32>, vector<8x8xf32>, vector<8x8xf32> -> vector<24x8xf32>
    %60 = vector.extract_strided_slice %57 {offsets = [8, 0], sizes = [24, 8], strides = [1, 1]} : vector<32x8xf32> to vector<24x8xf32>
    %61 = arith.subf %59, %60 : vector<24x8xf32>
    %cst_18 = arith.constant 9.99999997E-7 : f32
    %62 = vector.broadcast %cst_18 : f32 to vector<24x8xf32>
    %63 = arith.addf %61, %62 : vector<24x8xf32>
    %64 = arith.mulf %63, %63 : vector<24x8xf32>
    %cst_19 = arith.constant dense<0.000000e+00> : vector<24xf32>
    %65 = vector.multi_reduction <add>, %64, %cst_19 [1] : vector<24x8xf32> to vector<24xf32>
    %66 = vector.shape_cast %65 : vector<24xf32> to vector<24x1xf32>
    %67 = math.sqrt %66 : vector<24x1xf32>
    %cst_20 = arith.constant 2.000000e+00 : f32
    %68 = vector.broadcast %cst_20 : f32 to vector<24x1xf32>
    %69 = arith.subf %68, %67 : vector<24x1xf32>
    %cst_21 = arith.constant 5.000000e-01 : f32
    %70 = vector.broadcast %cst_21 : f32 to vector<24x1xf32>
    %71 = arith.mulf %69, %70 : vector<24x1xf32>
    %72 = vector.extract_strided_slice %71 {offsets = [0, 0], sizes = [8, 1], strides = [1, 1]} : vector<24x1xf32> to vector<8x1xf32>
    %73 = vector.extract_strided_slice %71 {offsets = [8, 0], sizes = [8, 1], strides = [1, 1]} : vector<24x1xf32> to vector<8x1xf32>
    %74 = vector.extract_strided_slice %71 {offsets = [16, 0], sizes = [8, 1], strides = [1, 1]} : vector<24x1xf32> to vector<8x1xf32>
    %75 = tpu.concatenate %45, %46 in 0 : vector<8x1xf32>, vector<8x1xf32> -> vector<16x1xf32>
    %cst_22 = arith.constant 0.000000e+00 : f32
    %76 = vector.broadcast %cst_22 : f32 to vector<16x1xf32>
    %77 = arith.subf %76, %75 : vector<16x1xf32>
    %78 = math.exp %77 : vector<16x1xf32>
    %cst_23 = arith.constant 1.000000e+00 : f32
    %79 = vector.broadcast %cst_23 : f32 to vector<16x1xf32>
    %80 = arith.addf %79, %78 : vector<16x1xf32>
    %cst_24 = arith.constant 1.000000e+00 : f32
    %81 = vector.broadcast %cst_24 : f32 to vector<16x1xf32>
    %82 = arith.divf %81, %80 : vector<16x1xf32>
    %83 = vector.extract_strided_slice %82 {offsets = [0, 0], sizes = [8, 1], strides = [1, 1]} : vector<16x1xf32> to vector<8x1xf32>
    %84 = vector.extract_strided_slice %82 {offsets = [8, 0], sizes = [8, 1], strides = [1, 1]} : vector<16x1xf32> to vector<8x1xf32>
    %85 = arith.addf %83, %73 : vector<8x1xf32>
    %cst_25 = arith.constant 5.000000e-01 : f32
    %86 = vector.broadcast %cst_25 : f32 to vector<8x1xf32>
    %87 = arith.mulf %86, %85 : vector<8x1xf32>
    %88 = arith.addf %84, %74 : vector<8x1xf32>
    %cst_26 = arith.constant 5.000000e-01 : f32
    %89 = vector.broadcast %cst_26 : f32 to vector<8x1xf32>
    %90 = arith.mulf %89, %88 : vector<8x1xf32>
    %91 = arith.addf %87, %90 : vector<8x1xf32>
    %92 = tpu.reciprocal %91 {approx = true} : vector<8x1xf32> -> vector<8x1xf32>
    %93 = arith.mulf %87, %92 : vector<8x1xf32>
    %94 = arith.mulf %93, %42 : vector<8x1xf32>
    %95 = arith.mulf %90, %92 : vector<8x1xf32>
    %96 = arith.mulf %95, %43 : vector<8x1xf32>
    %97 = arith.addf %94, %96 : vector<8x1xf32>
    %98 = arith.subf %73, %74 : vector<8x1xf32>
    %99 = arith.subf %72, %73 : vector<8x1xf32>
    %100 = arith.subf %41, %97 : vector<8x1xf32>
    %101 = tpu.concatenate %44, %98, %99, %100 in 1 : vector<8x1xf32>, vector<8x1xf32>, vector<8x1xf32>, vector<8x1xf32> -> vector<8x4xf32>
    %cst_27 = arith.constant 0.000000e+00 : f32
    %102 = vector.broadcast %cst_27 : f32 to vector<8x4xf32>
    %103 = arith.subf %102, %101 : vector<8x4xf32>
    %cst_28 = arith.constant 0.000000e+00 : f32
    %104 = vector.broadcast %cst_28 : f32 to vector<8x4xf32>
    %105 = arith.maximumf %103, %104 : vector<8x4xf32>
    %106 = math.absf %101 : vector<8x4xf32>
    %cst_29 = arith.constant 0.000000e+00 : f32
    %107 = vector.broadcast %cst_29 : f32 to vector<8x4xf32>
    %108 = arith.subf %107, %106 : vector<8x4xf32>
    %109 = math.exp %108 : vector<8x4xf32>
    %cst_30 = arith.constant 1.000000e+00 : f32
    %110 = vector.broadcast %cst_30 : f32 to vector<8x4xf32>
    %111 = arith.addf %110, %109 : vector<8x4xf32>
    %112 = math.log %111 : vector<8x4xf32>
    %113 = arith.addf %105, %112 : vector<8x4xf32>
    %114 = tpu.iota {dimensions = array<i32: 1>} : vector<8x4xi32>
    %c3_i32 = arith.constant 3 : i32
    %115 = vector.broadcast %c3_i32 : i32 to vector<8x4xi32>
    %116 = arith.cmpi eq, %114, %115 : vector<8x4xi32>
    %c0_i32_31 = arith.constant 0 : i32
    %117 = vector.broadcast %c0_i32_31 : i32 to vector<8x4xi32>
    %118 = arith.cmpi eq, %114, %117 : vector<8x4xi32>
    %cst_32 = arith.constant 0.00999999977 : f32
    %cst_33 = arith.constant 5.000000e-03 : f32
    %119 = vector.broadcast %cst_32 : f32 to vector<8x4xf32>
    %120 = vector.broadcast %cst_33 : f32 to vector<8x4xf32>
    %121 = arith.select %118, %119, %120 : vector<8x4xi1>, vector<8x4xf32>
    %cst_34 = arith.constant 1.000000e+00 : f32
    %122 = vector.broadcast %cst_34 : f32 to vector<8x4xf32>
    %123 = arith.select %116, %122, %121 : vector<8x4xi1>, vector<8x4xf32>
    %cst_35 = arith.constant 1.250000e-01 : f32
    %124 = vector.broadcast %cst_35 : f32 to vector<8x4xf32>
    %125 = arith.mulf %123, %124 : vector<8x4xf32>
    %126 = arith.mulf %113, %125 : vector<8x4xf32>
    %127 = vector.shape_cast %126 : vector<8x4xf32> to vector<1x8x4xf32>
    %cst_36 = arith.constant dense<0.000000e+00> : vector<1xf32>
    %128 = vector.multi_reduction <add>, %127, %cst_36 [1, 2] : vector<1x8x4xf32> to vector<1xf32>
    %129 = vector.shape_cast %128 : vector<1xf32> to vector<1x1x1xf32>
    %130 = vector.extract %129[0, 0, 0] : f32 from vector<1x1x1xf32>
    %131 = arith.addf %130, %31 : f32
    %132 = arith.index_cast %arg0 : i32 to index
    %c0_37 = arith.constant 0 : index
    %133 = memref.load %arg5[%132, %c0_37] : memref<4x1xf32, #tpu.memory_space<smem>>
    memref.store %131, %arg5[%132, %c0_37] : memref<4x1xf32, #tpu.memory_space<smem>>
    return
  }
  func.func @transform_0(%arg0: i32) -> (i32, i32) {
    %c0_i32 = arith.constant 0 : i32
    %c0_i32_0 = arith.constant 0 : i32
    %c0_i32_1 = arith.constant 0 : i32
    return %c0_i32, %c0_i32_0 : i32, i32
  }
  func.func @transform_1(%arg0: i32) -> (i32, i32) {
    %c0_i32 = arith.constant 0 : i32
    %c0_i32_0 = arith.constant 0 : i32
    %c0_i32_1 = arith.constant 0 : i32
    return %c0_i32, %c0_i32_0 : i32, i32
  }
  func.func @transform_2(%arg0: i32) -> (i32, i32) {
    %c0_i32 = arith.constant 0 : i32
    %c0_i32_0 = arith.constant 0 : i32
    %c0_i32_1 = arith.constant 0 : i32
    return %c0_i32, %c0_i32_0 : i32, i32
  }
  func.func @transform_3(%arg0: i32) -> (i32, i32) {
    %c0_i32 = arith.constant 0 : i32
    %c0_i32_0 = arith.constant 0 : i32
    return %arg0, %c0_i32 : i32, i32
  }
  func.func @transform_4(%arg0: i32) -> (i32, i32) {
    %c0_i32 = arith.constant 0 : i32
    %c0_i32_0 = arith.constant 0 : i32
    %c0_i32_1 = arith.constant 0 : i32
    return %c0_i32, %c0_i32_0 : i32, i32
  }
}

</mosaic_0001>

<llo_original>
// kernel: eq.12
$region0: #{eq.12}
  %s0 = inlined_call_operand.vmem [shape: s32[4,6,8], index: 0, kind: input, shape index: {}]
  %s1 = inlined_call_operand.vmem [shape: s32[192], index: 1, kind: output, shape index: {}]
  $region1: #{eq.12} parent=0
    #allocation0 [shape = 'u8[4096]{0}', space=vmem, size = 0x1000, scoped, tag = 'scoped mem for output reshape']
    %s2 = smov 3
    %v3 = vld [vmem:[%s0] ss:$20 sm:%s2]
    %vm4 = vcmask 64512
    %5 = vst.msk [vmem:[#allocation0] sm:$0x3] %vm4, %v3
    %s6 = scalar_lea.vmem %s0, 19
    %v7 = vld [vmem:[%s6] sm:$0x1]
    %8 = vrot.lane.b32.xlu0 %v7, 120
    %v9 = vpop.permute.xlu0 %8
    %vm10 = vcmask 1048512
    %11 = vst.msk [vmem:[#allocation0] sm:$0x1] %vm10, %v9
    %s12 = scalar_lea.vmem %s0, 18
    %v13 = vld [vmem:[%s12] sm:$0x1]
    %14 = vrot.lane.b32.xlu0 %v13, 112
    %v15 = vpop.permute.xlu0 %14
    %vm16 = vcmask 982912
    %17 = vst.msk [vmem:[#allocation0] sm:$0x1] %vm16, %v15
    %s18 = scalar_lea.vmem %s0, 17
    %v19 = vld [vmem:[%s18] sm:$0x1]
    %20 = vrot.lane.b32.xlu0 %v19, 104
    %v21 = vpop.permute.xlu0 %20
    %vm22 = vcmask 917312
    %23 = vst.msk [vmem:[#allocation0] sm:$0x1] %vm22, %v21
    %s24 = scalar_lea.vmem %s0, 16
    %v25 = vld [vmem:[%s24] sm:$0x1]
    %26 = vrot.lane.b32.xlu0 %v25, 96
    %v27 = vpop.permute.xlu0 %26
    %vm28 = vcmask 851712
    %29 = vst.msk [vmem:[#allocation0] sm:$0x1] %vm28, %v27
    %s30 = scalar_lea.vmem %s0, 13
    %v31 = vld [vmem:[%s30] sm:$0x1]
    %32 = vrot.lane.b32.xlu0 %v31, 88
    %v33 = vpop.permute.xlu0 %32
    %vm34 = vcmask 786112
    %35 = vst.msk [vmem:[#allocation0] sm:$0x1] %vm34, %v33
    %s36 = scalar_lea.vmem %s0, 12
    %v37 = vld [vmem:[%s36] sm:$0x1]
    %38 = vrot.lane.b32.xlu0 %v37, 80
    %v39 = vpop.permute.xlu0 %38
    %vm40 = vcmask 720512
    %41 = vst.msk [vmem:[#allocation0] sm:$0x1] %vm40, %v39
    %s42 = scalar_lea.vmem %s0, 11
    %v43 = vld [vmem:[%s42] sm:$0x1]
    %44 = vrot.lane.b32.xlu0 %v43, 72
    %v45 = vpop.permute.xlu0 %44
    %vm46 = vcmask 654912
    %47 = vst.msk [vmem:[#allocation0] sm:$0x1] %vm46, %v45
    %s48 = scalar_lea.vmem %s0, 10
    %v49 = vld [vmem:[%s48] sm:$0x1]
    %50 = vrot.lane.b32.xlu0 %v49, 64
    %v51 = vpop.permute.xlu0 %50
    %vm52 = vcmask 589312
    %53 = vst.msk [vmem:[#allocation0] sm:$0x1] %vm52, %v51
    %s54 = scalar_lea.vmem %s0, 9
    %s55 = smov 3
    %v56 = vld [vmem:[%s54] ss:$20 sm:%s55]
    %57 = vrot.lane.b32.xlu0 %v56, 56
    %v58 = vpop.permute.xlu0 %57
    %vm59 = vcmask 523712
    %60 = vst.msk [vmem:[#allocation0] sm:$0x3] %vm59, %v58
    %s61 = scalar_lea.vmem %s0, 8
    %s62 = smov 3
    %v63 = vld [vmem:[%s61] ss:$20 sm:%s62]
    %64 = vrot.lane.b32.xlu0 %v63, 48
    %v65 = vpop.permute.xlu0 %64
    %vm66 = vcmask 458112
    %67 = vst.msk [vmem:[#allocation0] sm:$0x3] %vm66, %v65
    %s68 = scalar_lea.vmem %s0, 5
    %s69 = smov 3
    %v70 = vld [vmem:[%s68] ss:$22 sm:%s69]
    %71 = vrot.lane.b32.xlu0 %v70, 40
    %v72 = vpop.permute.xlu0 %71
    %vm73 = vcmask 392512
    %74 = vst.msk [vmem:[#allocation0] sm:$0x3] %vm73, %v72
    %s75 = scalar_lea.vmem %s0, 4
    %s76 = smov 3
    %v77 = vld [vmem:[%s75] ss:$22 sm:%s76]
    %78 = vrot.lane.b32.xlu0 %v77, 32
    %v79 = vpop.permute.xlu0 %78
    %vm80 = vcmask 326912
    %81 = vst.msk [vmem:[#allocation0] sm:$0x3] %vm80, %v79
    %s82 = scalar_lea.vmem %s0, 3
    %s83 = smov 3
    %v84 = vld [vmem:[%s82] ss:$22 sm:%s83]
    %85 = vrot.lane.b32.xlu0 %v84, 24
    %v86 = vpop.permute.xlu0 %85
    %vm87 = vcmask 261312
    %88 = vst.msk [vmem:[#allocation0] sm:$0x3] %vm87, %v86
    %s89 = scalar_lea.vmem %s0, 2
    %s90 = smov 3
    %v91 = vld [vmem:[%s89] ss:$22 sm:%s90]
    %92 = vrot.lane.b32.xlu0 %v91, 16
    %v93 = vpop.permute.xlu0 %92
    %vm94 = vcmask 195712
    %95 = vst.msk [vmem:[#allocation0] sm:$0x3] %vm94, %v93
    %s96 = scalar_lea.vmem %s0, 1
    %s97 = smov 3
    %v98 = vld [vmem:[%s96] ss:$20 sm:%s97]
    %99 = vrot.lane.b32.xlu0 %v98, 8
    %v100 = vpop.permute.xlu0 %99
    %vm101 = vcmask 130112
    %102 = vst.msk [vmem:[#allocation0] sm:$0x3] %vm101, %v100
    %s104 = sshll.u32 1, 2
    %s105 = ssub.s32 %s104, 1
    %v107 = vld [vmem:[#allocation0] sm:%s105]
    %s108 = sshll.u32 1, 2
    %s109 = ssub.s32 %s108, 1
    %110 = vst [vmem:[%s1] sm:%s109] %v107

// kernel: multi_fawmf_forward_batched.1
$region0: #{multi_fawmf_forward_batched.1}
  #allocation0 [shape = 'u32[]', space=smem, size = 0x4, offset = 0x4, fixed_abs, tag = 'smem constant byte address 0x4 - core index']
  #allocation1 [shape = 'u32[144,128]{1,0:T(1,128)}', space=vmem, size = 0x12000, scoped, tag = 'internal scratch']
  #allocation2 [shape = 'f32[64,32]{1,0:T(8,128)}', space=vmem, size = 0x8000, scoped, tag = 'scratch operand']
  %s0 = inlined_call_operand.vmem [shape: f32[64,64], index: 0, kind: input, shape index: {}]
  %s1 = inlined_call_operand.vmem [shape: f32[64,24], index: 1, kind: input, shape index: {}]
  %s2 = inlined_call_operand.vmem [shape: f32[64,8], index: 2, kind: input, shape index: {}]
  %s3 = inlined_call_operand.vmem [shape: f32[192,64], index: 3, kind: input, shape index: {}]
  %s4 = inlined_call_operand.vmem [shape: f32[4,1], index: 4, kind: output, shape index: {}]
  %s5 = sld [smem:[#allocation0]]
  $region53: #{multi_fawmf_forward_batched.1} parent=0
    _
  %s7 = ssub.s32 1, %s5
  %s8 = scalar_select 0, %s7, %s5
  $region1: #{multi_fawmf_forward_batched.1} parent=0
    #allocation3 [shape = 'u8[2048]{0}', space=smem, size = 0x800, scoped, tag = 'output window, operand 0, single buffered']
    #allocation4 [shape = 's32[2]{0}', space=sflag, size = 0x8, scoped, tag = 'scoped memory for multi_fawmf_forward_batched.1']
    %9 = vsyncpa [#allocation4], 0
    loop: start=0, step=1, limit=6
    $region2: #{multi_fawmf_forward_batched.1} parent=1 // loop_pre_header
      _
    $region3: #{multi_fawmf_forward_batched.1} parent=1 // loop_header
      %s11 = sphi 0, %s15
      %p12 = scmp.ge.s32.totalorder %s11, 6
      %s19 = sphi 0, %s19
      %s21 = sphi 0, %s19
      %s22 = sphi 0, %s21
      %s36 = sphi 0, %s22
      %s40 = sphi 0, %s40
      %s42 = sphi 0, %s40
      %s43 = sphi 0, %s42
      %s57 = sphi 0, %s43
      %s61 = sphi 0, %s61
      %s63 = sphi 0, %s61
      %s64 = sphi 0, %s63
      %s78 = sphi 0, %s64
      %s84 = sphi 0, %s86
      %s87 = sphi 0, %s84
      %s88 = sphi 0, %s87
      %s104 = sphi 0, %s88
      %s108 = sphi 0, %s108
      %s110 = sphi 0, %s108
      %s111 = sphi 0, %s110
      %s125 = sphi 0, %s111
    $region4: #{multi_fawmf_forward_batched.1} parent=1 // loop_header_branch
      %14 = sbr.rel (%p12) target = $region8
    $region5: #{multi_fawmf_forward_batched.1} parent=1 // loop_body
      %s16 = ssub.s32 %s11, 1
      %s17 = ssub.s32 %s11, 2
      %s18 = sadd.s32 %s11, 1
      %s20 = sadd.s32 %s19, 1
      %p23 = scmp.eq.s32.totalorder %s11, 3
      %p24 = scmp.ne.s32.totalorder %s19, %s21
      %p25 = scmp.eq.s32.totalorder %s11, 0
      %p26 = por %p24, %p25
      %p27 = scmp.ne.s32.totalorder %s19, %s21
      %p28 = scmp.eq.s32.totalorder %s16, 3
      %p29 = por %p27, %p28
      %p30 = scmp.ne.s32.totalorder %s21, %s22
      %p31 = scmp.eq.s32.totalorder %s16, 0
      %p32 = por %p30, %p31
      %p33 = scmp.ne.s32.totalorder %s21, %s22
      %p34 = scmp.eq.s32.totalorder %s17, 3
      %p35 = por %p33, %p34
      %p37 = scmp.ne.s32.totalorder %s22, %s36
      %p38 = scmp.eq.s32.totalorder %s17, 0
      %p39 = por %p37, %p38
      %s41 = sadd.s32 %s40, 1
      %p44 = scmp.eq.s32.totalorder %s11, 3
      %p45 = scmp.ne.s32.totalorder %s40, %s42
      %p46 = scmp.eq.s32.totalorder %s11, 0
      %p47 = por %p45, %p46
      %p48 = scmp.ne.s32.totalorder %s40, %s42
      %p49 = scmp.eq.s32.totalorder %s16, 3
      %p50 = por %p48, %p49
      %p51 = scmp.ne.s32.totalorder %s42, %s43
      %p52 = scmp.eq.s32.totalorder %s16, 0
      %p53 = por %p51, %p52
      %p54 = scmp.ne.s32.totalorder %s42, %s43
      %p55 = scmp.eq.s32.totalorder %s17, 3
      %p56 = por %p54, %p55
      %p58 = scmp.ne.s32.totalorder %s43, %s57
      %p59 = scmp.eq.s32.totalorder %s17, 0
      %p60 = por %p58, %p59
      %s62 = sadd.s32 %s61, 1
      %p65 = scmp.eq.s32.totalorder %s11, 3
      %p66 = scmp.ne.s32.totalorder %s61, %s63
      %p67 = scmp.eq.s32.totalorder %s11, 0
      %p68 = por %p66, %p67
      %p69 = scmp.ne.s32.totalorder %s61, %s63
      %p70 = scmp.eq.s32.totalorder %s16, 3
      %p71 = por %p69, %p70
      %p72 = scmp.ne.s32.totalorder %s63, %s64
      %p73 = scmp.eq.s32.totalorder %s16, 0
      %p74 = por %p72, %p73
      %p75 = scmp.ne.s32.totalorder %s63, %s64
      %p76 = scmp.eq.s32.totalorder %s17, 3
      %p77 = por %p75, %p76
      %p79 = scmp.ne.s32.totalorder %s64, %s78
      %p80 = scmp.eq.s32.totalorder %s17, 0
      %p81 = por %p79, %p80
      %s82 = ssub.s32 %s11, %s18
      %p83 = scmp.eq.s32.totalorder %s82, 0
      %s85 = sadd.s32 %s84, 1
      %s86 = scalar_select %p83, %s84, %s85
      %p89 = pneg %p83
      %p90 = scmp.eq.s32.totalorder %s11, 3
      %p91 = por %p89, %p90
      %p92 = scmp.ne.s32.totalorder %s84, %s87
      %p93 = scmp.eq.s32.totalorder %s11, 0
      %p94 = por %p92, %p93
      %p95 = scmp.ne.s32.totalorder %s84, %s87
      %p96 = scmp.eq.s32.totalorder %s16, 3
      %p97 = por %p95, %p96
      %p98 = scmp.ne.s32.totalorder %s87, %s88
      %p99 = scmp.eq.s32.totalorder %s16, 0
      %p100 = por %p98, %p99
      %p101 = scmp.ne.s32.totalorder %s87, %s88
      %p102 = scmp.eq.s32.totalorder %s17, 3
      %p103 = por %p101, %p102
      %p105 = scmp.ne.s32.totalorder %s88, %s104
      %p106 = scmp.eq.s32.totalorder %s17, 0
      %p107 = por %p105, %p106
      %s109 = sadd.s32 %s108, 1
      %p112 = scmp.eq.s32.totalorder %s11, 3
      %p113 = scmp.ne.s32.totalorder %s108, %s110
      %p114 = scmp.eq.s32.totalorder %s11, 0
      %p115 = por %p113, %p114
      %p116 = scmp.ne.s32.totalorder %s108, %s110
      %p117 = scmp.eq.s32.totalorder %s16, 3
      %p118 = por %p116, %p117
      %p119 = scmp.ne.s32.totalorder %s110, %s111
      %p120 = scmp.eq.s32.totalorder %s16, 0
      %p121 = por %p119, %p120
      %p122 = scmp.ne.s32.totalorder %s110, %s111
      %p123 = scmp.eq.s32.totalorder %s17, 3
      %p124 = por %p122, %p123
      %p126 = scmp.ne.s32.totalorder %s111, %s125
      %p127 = scmp.eq.s32.totalorder %s17, 0
      %p128 = por %p126, %p127
      %p129 = scmp.le.s32.totalorder 1, %s11
      %p130 = scmp.lt.s32.totalorder %s11, 5
      %p131 = pnand %p129, %p130
      %p132 = pneg %p131
      // Predicated region
      $region9: #{multi_fawmf_forward_batched.1} parent=5 // pred_check
        _
      $region10: #{multi_fawmf_forward_batched.1} parent=5 // pred_check_branch
        %134 = sbr.rel (%p131) target = $region12
      $region11: #{multi_fawmf_forward_batched.1} parent=5 // pred_region
        %s135 = ssub.s32 %s11, 1
        // Predicated region
        $region13: #{multi_fawmf_forward_batched.1} parent=11 // pred_check
          %p136 = pneg %p32
        $region14: #{multi_fawmf_forward_batched.1} parent=11 // pred_check_branch
          %138 = sbr.rel (%p136) target = $region16
        $region15: #{multi_fawmf_forward_batched.1} parent=11 // pred_region
          _
        $region16: #{multi_fawmf_forward_batched.1} parent=11 // pred_fallthru
          _
        // Predicated region
        $region17: #{multi_fawmf_forward_batched.1} parent=11 // pred_check
          %p139 = pneg %p53
        $region18: #{multi_fawmf_forward_batched.1} parent=11 // pred_check_branch
          %141 = sbr.rel (%p139) target = $region20
        $region19: #{multi_fawmf_forward_batched.1} parent=11 // pred_region
          _
        $region20: #{multi_fawmf_forward_batched.1} parent=11 // pred_fallthru
          _
        // Predicated region
        $region21: #{multi_fawmf_forward_batched.1} parent=11 // pred_check
          %p142 = pneg %p74
        $region22: #{multi_fawmf_forward_batched.1} parent=11 // pred_check_branch
          %144 = sbr.rel (%p142) target = $region24
        $region23: #{multi_fawmf_forward_batched.1} parent=11 // pred_region
          _
        $region24: #{multi_fawmf_forward_batched.1} parent=11 // pred_fallthru
          _
      $region12: #{multi_fawmf_forward_batched.1} parent=5 // pred_fallthru
        _
      %p145 = scmp.lt.s32.totalorder %s11, 4
      // Predicated region
      $region25: #{multi_fawmf_forward_batched.1} parent=5 // pred_check
        %p146 = pneg %p145
      $region26: #{multi_fawmf_forward_batched.1} parent=5 // pred_check_branch
        %148 = sbr.rel (%p146) target = $region28
      $region27: #{multi_fawmf_forward_batched.1} parent=5 // pred_region
        // Predicated region
        $region29: #{multi_fawmf_forward_batched.1} parent=27 // pred_check
          %p149 = pneg %p94
        $region30: #{multi_fawmf_forward_batched.1} parent=27 // pred_check_branch
          %151 = sbr.rel (%p149) target = $region32
        $region31: #{multi_fawmf_forward_batched.1} parent=27 // pred_region
          %s152 = smul.u32 6, %s11
          %p153 = scmp.lt.s32.totalorder %s152, 23
          %s154 = scalar_select %p153, %s152, 23
          %s155 = smul.addr %s154, 8
          %s156 = scalar_lea.vmem %s3, %s155
          %s157 = smul.u32 6, %s11
        $region32: #{multi_fawmf_forward_batched.1} parent=27 // pred_fallthru
          _
      $region28: #{multi_fawmf_forward_batched.1} parent=5 // pred_fallthru
        _
      %p158 = scmp.le.s32.totalorder 1, %s11
      %p159 = scmp.lt.s32.totalorder %s11, 5
      %p160 = pnand %p158, %p159
      %p161 = pneg %p160
      // Predicated region
      $region33: #{multi_fawmf_forward_batched.1} parent=5 // pred_check
        _
      $region34: #{multi_fawmf_forward_batched.1} parent=5 // pred_check_branch
        %163 = sbr.rel (%p160) target = $region36
      $region35: #{multi_fawmf_forward_batched.1} parent=5 // pred_region
        %s164 = ssub.s32 %s11, 1
        %p165 = pneg %p32
        %p166 = pneg %p29
        %p167 = pneg %p53
        %p168 = pneg %p50
        %p169 = pneg %p74
        %p170 = pneg %p71
        %s171 = smul.u32 6, %s16
        %p172 = scmp.lt.s32.totalorder %s171, 23
        %s173 = scalar_select %p172, %s171, 23
        %s174 = smul.addr %s173, 8
        %s175 = scalar_lea.vmem %s3, %s174
        %p176 = pneg %p100
        %p177 = pneg %p97
        %p178 = pneg %p121
        %p179 = pneg %p118
        %s180 = smul.u32 6, %s16
        %p181 = scmp.lt.s32.totalorder %s180, 23
        %s182 = scalar_select %p181, %s180, 23
        %s183 = smul.addr %s182, 8
        %s184 = scalar_lea.vmem %s3, %s183
        %s185 = smul.u32 6, %s16
        %p186 = scmp.eq.s32.totalorder %s16, 0
        // Predicated region
        $region37: #{multi_fawmf_forward_batched.1} parent=35 // pred_check
          %p187 = pneg %p186
        $region38: #{multi_fawmf_forward_batched.1} parent=35 // pred_check_branch
          %189 = sbr.rel (%p187) target = $region40
        $region39: #{multi_fawmf_forward_batched.1} parent=35 // pred_region
          %v190 = vld [vmem:[%s0] sm:$0xff]
          %v191 = vld [vmem:[%s0 + $0x8] sm:$0xff]
          %v192 = vld [vmem:[%s0 + $0x10] sm:$0xff]
          %v193 = vld [vmem:[%s0 + $0x18] sm:$0xff]
          %v194 = vld [vmem:[%s0 + $0x20] sm:$0xff]
          %v195 = vld [vmem:[%s0 + $0x28] sm:$0xff]
          %v196 = vld [vmem:[%s0 + $0x30] sm:$0xff]
          %v197 = vld [vmem:[%s0 + $0x38] sm:$0xff]
          %v198 = vld [vmem:[%s2] sm:$0xff]
          %v199 = vld [vmem:[%s2 + $0x8] sm:$0xff]
          %v200 = vld [vmem:[%s2 + $0x10] sm:$0xff]
          %v201 = vld [vmem:[%s2 + $0x18] sm:$0xff]
          %v202 = vld [vmem:[%s2 + $0x20] sm:$0xff]
          %v203 = vld [vmem:[%s2 + $0x28] sm:$0xff]
          %v204 = vld [vmem:[%s2 + $0x30] sm:$0xff]
          %v205 = vld [vmem:[%s2 + $0x38] sm:$0xff]
          %v206 = vmul.f32 %v198, %v198
          %v207 = vmul.f32 %v199, %v199
          %v208 = vmul.f32 %v200, %v200
          %v209 = vmul.f32 %v201, %v201
          %v210 = vmul.f32 %v202, %v202
          %v211 = vmul.f32 %v203, %v203
          %v212 = vmul.f32 %v204, %v204
          %v213 = vmul.f32 %v205, %v205
          %vm214 = vcmask 64512
          %v215 = vsel %vm214, %v206, 0.0
          %216 = vadd.xlane.f32.xlu0 %v215
          %v217 = vpop.xlane.xlu0 %216
          %v218 = vsel %vm214, %v207, 0.0
          %219 = vadd.xlane.f32.xlu0 %v218
          %v220 = vpop.xlane.xlu0 %219
          %v221 = vsel %vm214, %v208, 0.0
          %222 = vadd.xlane.f32.xlu0 %v221
          %v223 = vpop.xlane.xlu0 %222
          %v224 = vsel %vm214, %v209, 0.0
          %225 = vadd.xlane.f32.xlu0 %v224
          %v226 = vpop.xlane.xlu0 %225
          %v227 = vsel %vm214, %v210, 0.0
          %228 = vadd.xlane.f32.xlu0 %v227
          %v229 = vpop.xlane.xlu0 %228
          %v230 = vsel %vm214, %v211, 0.0
          %231 = vadd.xlane.f32.xlu0 %v230
          %v232 = vpop.xlane.xlu0 %231
          %v233 = vsel %vm214, %v212, 0.0
          %234 = vadd.xlane.f32.xlu0 %v233
          %v235 = vpop.xlane.xlu0 %234
          %v236 = vsel %vm214, %v213, 0.0
          %237 = vadd.xlane.f32.xlu0 %v236
          %v238 = vpop.xlane.xlu0 %237
          %v239 = vmax.f32 %v217, 1e-24
          %v240 = vmax.f32 %v220, 1e-24
          %v241 = vmax.f32 %v223, 1e-24
          %v242 = vmax.f32 %v226, 1e-24
          %v243 = vmax.f32 %v229, 1e-24
          %v244 = vmax.f32 %v232, 1e-24
          %v245 = vmax.f32 %v235, 1e-24
          %v246 = vmax.f32 %v238, 1e-24
          %v247 = vrsqrt.pop %v239
          %v248 = vrsqrt.pop %v240
          %v249 = vrsqrt.pop %v241
          %v250 = vrsqrt.pop %v242
          %v251 = vrsqrt.pop %v243
          %v252 = vrsqrt.pop %v244
          %v253 = vrsqrt.pop %v245
          %v254 = vrsqrt.pop %v246
          %v255 = vmul.f32 %v198, %v247
          %v256 = vmul.f32 %v199, %v248
          %v257 = vmul.f32 %v200, %v249
          %v258 = vmul.f32 %v201, %v250
          %v259 = vmul.f32 %v202, %v251
          %v260 = vmul.f32 %v203, %v252
          %v261 = vmul.f32 %v204, %v253
          %v262 = vmul.f32 %v205, %v254
          %vm263 = vcmask 523264
          %v265 = vsel %vm263, %v190, 0
          %v268 = vsel %vm263, %v191, 0
          %v271 = vsel %vm263, %v192, 0
          %v274 = vsel %vm263, %v193, 0
          %v277 = vsel %vm263, %v194, 0
          %v280 = vsel %vm263, %v195, 0
          %v283 = vsel %vm263, %v196, 0
          %v286 = vsel %vm263, %v197, 0
          %288 = vmatprep.subr.mxu0 0.0
          %289 = vmatpush1.msra.mxu0 0.0
          %290 = vmatprep.subr.mxu0 0.0
          %291 = vmatpush1.msra.mxu0 0.0
          %292 = vmatprep.subr.mxu0 0.0
          %293 = vmatpush1.msra.mxu0 0.0
          %294 = vmatprep.subr.mxu0 0.0
          %295 = vmatpush1.msra.mxu0 0.0
          %296 = vmatprep.subr.mxu0 0.0
          %297 = vmatpush1.msra.mxu0 0.0
          %298 = vmatprep.subr.mxu0 0.0
          %299 = vmatpush1.msra.mxu0 0.0
          %300 = vmatprep.subr.mxu0 0.0
          %301 = vmatpush1.msra.mxu0 0.0
          %302 = vmatprep.subr.mxu0 0.0
          %303 = vmatpush1.msra.mxu0 0.0
          %304 = vmatprep.subr.mxu0 0.0
          %305 = vmatpush1.msra.mxu0 %v262
          %306 = vmatprep.subr.mxu0 0.0
          %307 = vmatpush1.msra.mxu0 %v261
          %308 = vmatprep.subr.mxu0 0.0
          %309 = vmatpush1.msra.mxu0 %v260
          %310 = vmatprep.subr.mxu0 0.0
          %311 = vmatpush1.msra.mxu0 %v259
          %312 = vmatprep.subr.mxu0 0.0
          %313 = vmatpush1.msra.mxu0 %v258
          %314 = vmatprep.subr.mxu0 0.0
          %315 = vmatpush1.msra.mxu0 %v257
          %316 = vmatprep.subr.mxu0 0.0
          %317 = vmatpush1.msra.mxu0 %v256
          %318 = vmatprep.subr.mxu0 0.0
          %319 = vmatpush1.msra.mxu0 %v255
          %320 = vmatprep.subr.mxu0 0.0
          %321 = vmatpush2.msra.mxu0 0.0
          %322 = vmatprep.subr.mxu0 0.0
          %323 = vmatpush2.msra.mxu0 0.0
          %324 = vmatprep.subr.mxu0 0.0
          %325 = vmatpush2.msra.mxu0 0.0
          %326 = vmatprep.subr.mxu0 0.0
          %327 = vmatpush2.msra.mxu0 0.0
          %328 = vmatprep.subr.mxu0 0.0
          %329 = vmatpush2.msra.mxu0 0.0
          %330 = vmatprep.subr.mxu0 0.0
          %331 = vmatpush2.msra.mxu0 0.0
          %332 = vmatprep.subr.mxu0 0.0
          %333 = vmatpush2.msra.mxu0 0.0
          %334 = vmatprep.subr.mxu0 0.0
          %335 = vmatpush2.msra.mxu0 0.0
          %336 = vmatprep.subr.mxu0 0.0
          %337 = vmatpush2.msra.mxu0 0.0
          %338 = vmatprep.subr.mxu0 0.0
          %339 = vmatpush2.msra.mxu0 0.0
          %340 = vmatprep.subr.mxu0 0.0
          %341 = vmatpush2.msra.mxu0 0.0
          %342 = vmatprep.subr.mxu0 0.0
          %343 = vmatpush2.msra.mxu0 0.0
          %344 = vmatprep.subr.mxu0 0.0
          %345 = vmatpush2.msra.mxu0 0.0
          %346 = vmatprep.subr.mxu0 0.0
          %347 = vmatpush2.msra.mxu0 0.0
          %348 = vmatprep.subr.mxu0 0.0
          %349 = vmatpush2.msra.mxu0 0.0
          %350 = vmatprep.subr.mxu0 0.0
          %351 = vmatpush2.msra.mxu0 0.0
          %352 = vmatprep.mubr.f32.mxu0 0.0
          %353 = vmatmul.mubr.f32.gmra.mxu0 %v265
          %v354 = vpop.f32.mrf.mxu0
          %v355 = vadd.f32 0.0, %v354
          %v356 = vpop.f32.mrf.mxu0
          %357 = vmatprep.mubr.f32.mxu0 0.0
          %358 = vmatmul.mubr.f32.gmra.mxu0 %v268
          %v359 = vpop.f32.mrf.mxu0
          %v360 = vadd.f32 0.0, %v359
          %v361 = vpop.f32.mrf.mxu0
          %362 = vmatprep.mubr.f32.mxu0 0.0
          %363 = vmatmul.mubr.f32.gmra.mxu0 %v271
          %v364 = vpop.f32.mrf.mxu0
          %v365 = vadd.f32 0.0, %v364
          %v366 = vpop.f32.mrf.mxu0
          %367 = vmatprep.mubr.f32.mxu0 0.0
          %368 = vmatmul.mubr.f32.gmra.mxu0 %v274
          %v369 = vpop.f32.mrf.mxu0
          %v370 = vadd.f32 0.0, %v369
          %v371 = vpop.f32.mrf.mxu0
          %372 = vmatprep.mubr.f32.mxu0 0.0
          %373 = vmatmul.mubr.f32.gmra.mxu0 %v277
          %v374 = vpop.f32.mrf.mxu0
          %v375 = vadd.f32 0.0, %v374
          %v376 = vpop.f32.mrf.mxu0
          %377 = vmatprep.mubr.f32.mxu0 0.0
          %378 = vmatmul.mubr.f32.gmra.mxu0 %v280
          %v379 = vpop.f32.mrf.mxu0
          %v380 = vadd.f32 0.0, %v379
          %v381 = vpop.f32.mrf.mxu0
          %382 = vmatprep.mubr.f32.mxu0 0.0
          %383 = vmatmul.mubr.f32.gmra.mxu0 %v283
          %v384 = vpop.f32.mrf.mxu0
          %v385 = vadd.f32 0.0, %v384
          %v386 = vpop.f32.mrf.mxu0
          %387 = vmatprep.mubr.f32.mxu0 0.0
          %388 = vmatmul.mubr.f32.gmra.mxu0 %v286
          %v389 = vpop.f32.mrf.mxu0
          %v390 = vadd.f32 0.0, %v389
          %v391 = vpop.f32.mrf.mxu0
          %392 = vdwg.mxu0
          %v393 = vmul.f32 %v355, %v355
          %v394 = vmul.f32 %v360, %v360
          %v395 = vmul.f32 %v365, %v365
          %v396 = vmul.f32 %v370, %v370
          %v397 = vmul.f32 %v375, %v375
          %v398 = vmul.f32 %v380, %v380
          %v399 = vmul.f32 %v385, %v385
          %v400 = vmul.f32 %v390, %v390
          %v401 = vsel %vm214, %v393, 0.0
          %402 = vadd.xlane.f32.xlu0 %v401
          %v403 = vpop.xlane.xlu0 %402
          %v404 = vsel %vm214, %v394, 0.0
          %405 = vadd.xlane.f32.xlu0 %v404
          %v406 = vpop.xlane.xlu0 %405
          %v407 = vsel %vm214, %v395, 0.0
          %408 = vadd.xlane.f32.xlu0 %v407
          %v409 = vpop.xlane.xlu0 %408
          %v410 = vsel %vm214, %v396, 0.0
          %411 = vadd.xlane.f32.xlu0 %v410
          %v412 = vpop.xlane.xlu0 %411
          %v413 = vsel %vm214, %v397, 0.0
          %414 = vadd.xlane.f32.xlu0 %v413
          %v415 = vpop.xlane.xlu0 %414
          %v416 = vsel %vm214, %v398, 0.0
          %417 = vadd.xlane.f32.xlu0 %v416
          %v418 = vpop.xlane.xlu0 %417
          %v419 = vsel %vm214, %v399, 0.0
          %420 = vadd.xlane.f32.xlu0 %v419
          %v421 = vpop.xlane.xlu0 %420
          %v422 = vsel %vm214, %v400, 0.0
          %423 = vadd.xlane.f32.xlu0 %v422
          %v424 = vpop.xlane.xlu0 %423
          %v425 = vmax.f32 %v403, 1e-24
          %v426 = vmax.f32 %v406, 1e-24
          %v427 = vmax.f32 %v409, 1e-24
          %v428 = vmax.f32 %v412, 1e-24
          %v429 = vmax.f32 %v415, 1e-24
          %v430 = vmax.f32 %v418, 1e-24
          %v431 = vmax.f32 %v421, 1e-24
          %v432 = vmax.f32 %v424, 1e-24
          %v433 = vrsqrt.pop %v425
          %v434 = vrsqrt.pop %v426
          %v435 = vrsqrt.pop %v427
          %v436 = vrsqrt.pop %v428
          %v437 = vrsqrt.pop %v429
          %v438 = vrsqrt.pop %v430
          %v439 = vrsqrt.pop %v431
          %v440 = vrsqrt.pop %v432
          %v441 = vmul.f32 %v355, %v433
          %v442 = vmul.f32 %v360, %v434
          %v443 = vmul.f32 %v365, %v435
          %v444 = vmul.f32 %v370, %v436
          %v445 = vmul.f32 %v375, %v437
          %v446 = vmul.f32 %v380, %v438
          %v447 = vmul.f32 %v385, %v439
          %v448 = vmul.f32 %v390, %v440
          %v449 = vadd.f32 %v255, %v441
          %v450 = vadd.f32 %v256, %v442
          %v451 = vadd.f32 %v257, %v443
          %v452 = vadd.f32 %v258, %v444
          %v453 = vadd.f32 %v259, %v445
          %v454 = vadd.f32 %v260, %v446
          %v455 = vadd.f32 %v261, %v447
          %v456 = vadd.f32 %v262, %v448
          %457 = vmatprep.subr.mxu0 0.0
          %458 = vmatpush1.msra.mxu0 0.0
          %459 = vmatprep.subr.mxu0 0.0
          %460 = vmatpush1.msra.mxu0 0.0
          %461 = vmatprep.subr.mxu0 0.0
          %462 = vmatpush1.msra.mxu0 0.0
          %463 = vmatprep.subr.mxu0 0.0
          %464 = vmatpush1.msra.mxu0 0.0
          %465 = vmatprep.subr.mxu0 0.0
          %466 = vmatpush1.msra.mxu0 0.0
          %467 = vmatprep.subr.mxu0 0.0
          %468 = vmatpush1.msra.mxu0 0.0
          %469 = vmatprep.subr.mxu0 0.0
          %470 = vmatpush1.msra.mxu0 0.0
          %471 = vmatprep.subr.mxu0 0.0
          %472 = vmatpush1.msra.mxu0 0.0
          %473 = vmatprep.subr.mxu0 0.0
          %474 = vmatpush1.msra.mxu0 %v448
          %475 = vmatprep.subr.mxu0 0.0
          %476 = vmatpush1.msra.mxu0 %v447
          %477 = vmatprep.subr.mxu0 0.0
          %478 = vmatpush1.msra.mxu0 %v446
          %479 = vmatprep.subr.mxu0 0.0
          %480 = vmatpush1.msra.mxu0 %v445
          %481 = vmatprep.subr.mxu0 0.0
          %482 = vmatpush1.msra.mxu0 %v444
          %483 = vmatprep.subr.mxu0 0.0
          %484 = vmatpush1.msra.mxu0 %v443
          %485 = vmatprep.subr.mxu0 0.0
          %486 = vmatpush1.msra.mxu0 %v442
          %487 = vmatprep.subr.mxu0 0.0
          %488 = vmatpush1.msra.mxu0 %v441
          %489 = vmatprep.subr.mxu0 0.0
          %490 = vmatpush2.msra.mxu0 0.0
          %491 = vmatprep.subr.mxu0 0.0
          %492 = vmatpush2.msra.mxu0 0.0
          %493 = vmatprep.subr.mxu0 0.0
          %494 = vmatpush2.msra.mxu0 0.0
          %495 = vmatprep.subr.mxu0 0.0
          %496 = vmatpush2.msra.mxu0 0.0
          %497 = vmatprep.subr.mxu0 0.0
          %498 = vmatpush2.msra.mxu0 0.0
          %499 = vmatprep.subr.mxu0 0.0
          %500 = vmatpush2.msra.mxu0 0.0
          %501 = vmatprep.subr.mxu0 0.0
          %502 = vmatpush2.msra.mxu0 0.0
          %503 = vmatprep.subr.mxu0 0.0
          %504 = vmatpush2.msra.mxu0 0.0
          %505 = vmatprep.subr.mxu0 0.0
          %506 = vmatpush2.msra.mxu0 0.0
          %507 = vmatprep.subr.mxu0 0.0
          %508 = vmatpush2.msra.mxu0 0.0
          %509 = vmatprep.subr.mxu0 0.0
          %510 = vmatpush2.msra.mxu0 0.0
          %511 = vmatprep.subr.mxu0 0.0
          %512 = vmatpush2.msra.mxu0 0.0
          %513 = vmatprep.subr.mxu0 0.0
          %514 = vmatpush2.msra.mxu0 0.0
          %515 = vmatprep.subr.mxu0 0.0
          %516 = vmatpush2.msra.mxu0 0.0
          %517 = vmatprep.subr.mxu0 0.0
          %518 = vmatpush2.msra.mxu0 0.0
          %519 = vmatprep.subr.mxu0 0.0
          %520 = vmatpush2.msra.mxu0 0.0
          %521 = vmatprep.mubr.f32.mxu0 0.0
          %522 = vmatmul.mubr.f32.gmra.mxu0 %v265
          %v523 = vpop.f32.mrf.mxu0
          %v524 = vadd.f32 0.0, %v523
          %v525 = vpop.f32.mrf.mxu0
          %526 = vmatprep.mubr.f32.mxu0 0.0
          %527 = vmatmul.mubr.f32.gmra.mxu0 %v268
          %v528 = vpop.f32.mrf.mxu0
          %v529 = vadd.f32 0.0, %v528
          %v530 = vpop.f32.mrf.mxu0
          %531 = vmatprep.mubr.f32.mxu0 0.0
          %532 = vmatmul.mubr.f32.gmra.mxu0 %v271
          %v533 = vpop.f32.mrf.mxu0
          %v534 = vadd.f32 0.0, %v533
          %v535 = vpop.f32.mrf.mxu0
          %536 = vmatprep.mubr.f32.mxu0 0.0
          %537 = vmatmul.mubr.f32.gmra.mxu0 %v274
          %v538 = vpop.f32.mrf.mxu0
          %v539 = vadd.f32 0.0, %v538
          %v540 = vpop.f32.mrf.mxu0
          %541 = vmatprep.mubr.f32.mxu0 0.0
          %542 = vmatmul.mubr.f32.gmra.mxu0 %v277
          %v543 = vpop.f32.mrf.mxu0
          %v544 = vadd.f32 0.0, %v543
          %v545 = vpop.f32.mrf.mxu0
          %546 = vmatprep.mubr.f32.mxu0 0.0
          %547 = vmatmul.mubr.f32.gmra.mxu0 %v280
          %v548 = vpop.f32.mrf.mxu0
          %v549 = vadd.f32 0.0, %v548
          %v550 = vpop.f32.mrf.mxu0
          %551 = vmatprep.mubr.f32.mxu0 0.0
          %552 = vmatmul.mubr.f32.gmra.mxu0 %v283
          %v553 = vpop.f32.mrf.mxu0
          %v554 = vadd.f32 0.0, %v553
          %v555 = vpop.f32.mrf.mxu0
          %556 = vmatprep.mubr.f32.mxu0 0.0
          %557 = vmatmul.mubr.f32.gmra.mxu0 %v286
          %v558 = vpop.f32.mrf.mxu0
          %v559 = vadd.f32 0.0, %v558
          %v560 = vpop.f32.mrf.mxu0
          %561 = vdwg.mxu0
          %v562 = vmul.f32 %v524, %v524
          %v563 = vmul.f32 %v529, %v529
          %v564 = vmul.f32 %v534, %v534
          %v565 = vmul.f32 %v539, %v539
          %v566 = vmul.f32 %v544, %v544
          %v567 = vmul.f32 %v549, %v549
          %v568 = vmul.f32 %v554, %v554
          %v569 = vmul.f32 %v559, %v559
          %v570 = vsel %vm214, %v562, 0.0
          %571 = vadd.xlane.f32.xlu0 %v570
          %v572 = vpop.xlane.xlu0 %571
          %v573 = vsel %vm214, %v563, 0.0
          %574 = vadd.xlane.f32.xlu0 %v573
          %v575 = vpop.xlane.xlu0 %574
          %v576 = vsel %vm214, %v564, 0.0
          %577 = vadd.xlane.f32.xlu0 %v576
          %v578 = vpop.xlane.xlu0 %577
          %v579 = vsel %vm214, %v565, 0.0
          %580 = vadd.xlane.f32.xlu0 %v579
          %v581 = vpop.xlane.xlu0 %580
          %v582 = vsel %vm214, %v566, 0.0
          %583 = vadd.xlane.f32.xlu0 %v582
          %v584 = vpop.xlane.xlu0 %583
          %v585 = vsel %vm214, %v567, 0.0
          %586 = vadd.xlane.f32.xlu0 %v585
          %v587 = vpop.xlane.xlu0 %586
          %v588 = vsel %vm214, %v568, 0.0
          %589 = vadd.xlane.f32.xlu0 %v588
          %v590 = vpop.xlane.xlu0 %589
          %v591 = vsel %vm214, %v569, 0.0
          %592 = vadd.xlane.f32.xlu0 %v591
          %v593 = vpop.xlane.xlu0 %592
          %v594 = vmax.f32 %v572, 1e-24
          %v595 = vmax.f32 %v575, 1e-24
          %v596 = vmax.f32 %v578, 1e-24
          %v597 = vmax.f32 %v581, 1e-24
          %v598 = vmax.f32 %v584, 1e-24
          %v599 = vmax.f32 %v587, 1e-24
          %v600 = vmax.f32 %v590, 1e-24
          %v601 = vmax.f32 %v593, 1e-24
          %v602 = vrsqrt.pop %v594
          %v603 = vrsqrt.pop %v595
          %v604 = vrsqrt.pop %v596
          %v605 = vrsqrt.pop %v597
          %v606 = vrsqrt.pop %v598
          %v607 = vrsqrt.pop %v599
          %v608 = vrsqrt.pop %v600
          %v609 = vrsqrt.pop %v601
          %v610 = vmul.f32 %v524, %v602
          %v611 = vmul.f32 %v529, %v603
          %v612 = vmul.f32 %v534, %v604
          %v613 = vmul.f32 %v539, %v605
          %v614 = vmul.f32 %v544, %v606
          %v615 = vmul.f32 %v549, %v607
          %v616 = vmul.f32 %v554, %v608
          %v617 = vmul.f32 %v559, %v609
          %v618 = vadd.f32 %v449, %v610
          %v619 = vadd.f32 %v450, %v611
          %v620 = vadd.f32 %v451, %v612
          %v621 = vadd.f32 %v452, %v613
          %v622 = vadd.f32 %v453, %v614
          %v623 = vadd.f32 %v454, %v615
          %v624 = vadd.f32 %v455, %v616
          %v625 = vadd.f32 %v456, %v617
          %v626 = vmul.f32 %v618, 0.33333334
          %v627 = vmul.f32 %v619, 0.33333334
          %v628 = vmul.f32 %v620, 0.33333334
          %v629 = vmul.f32 %v621, 0.33333334
          %v630 = vmul.f32 %v622, 0.33333334
          %v631 = vmul.f32 %v623, 0.33333334
          %v632 = vmul.f32 %v624, 0.33333334
          %v633 = vmul.f32 %v625, 0.33333334
          %v634 = vld [vmem:[%s1] sm:$0xff]
          %v635 = vld [vmem:[%s1 + $0x8] sm:$0xff]
          %v636 = vld [vmem:[%s1 + $0x10] sm:$0xff]
          %v637 = vld [vmem:[%s1 + $0x18] sm:$0xff]
          %v638 = vld [vmem:[%s1 + $0x20] sm:$0xff]
          %v639 = vld [vmem:[%s1 + $0x28] sm:$0xff]
          %v640 = vld [vmem:[%s1 + $0x30] sm:$0xff]
          %v641 = vld [vmem:[%s1 + $0x38] sm:$0xff]
          %650 = vrot.lane.b32.xlu0 %v626, 24
          %v651 = vpop.permute.xlu0 %650
          %652 = vrot.lane.b32.xlu0 %v627, 24
          %v653 = vpop.permute.xlu0 %652
          %654 = vrot.lane.b32.xlu0 %v628, 24
          %v655 = vpop.permute.xlu0 %654
          %656 = vrot.lane.b32.xlu0 %v629, 24
          %v657 = vpop.permute.xlu0 %656
          %658 = vrot.lane.b32.xlu0 %v630, 24
          %v659 = vpop.permute.xlu0 %658
          %660 = vrot.lane.b32.xlu0 %v631, 24
          %v661 = vpop.permute.xlu0 %660
          %662 = vrot.lane.b32.xlu0 %v632, 24
          %v663 = vpop.permute.xlu0 %662
          %664 = vrot.lane.b32.xlu0 %v633, 24
          %v665 = vpop.permute.xlu0 %664
          %vm674 = vcmask 195584
          %v675 = vsel %vm674, %v634, %v651
          %v676 = vsel %vm674, %v635, %v653
          %v677 = vsel %vm674, %v636, %v655
          %v678 = vsel %vm674, %v637, %v657
          %v679 = vsel %vm674, %v638, %v659
          %v680 = vsel %vm674, %v639, %v661
          %v681 = vsel %vm674, %v640, %v663
          %v682 = vsel %vm674, %v641, %v665
          %vm683 = vcmask 261120
          %684 = vst.msk [vmem:[#allocation2] sm:$0xff] %vm683, %v675
          %685 = vst.msk [vmem:[#allocation2 + $0x8] sm:$0xff] %vm683, %v676
          %686 = vst.msk [vmem:[#allocation2 + $0x10] sm:$0xff] %vm683, %v677
          %687 = vst.msk [vmem:[#allocation2 + $0x18] sm:$0xff] %vm683, %v678
          %688 = vst.msk [vmem:[#allocation2 + $0x20] sm:$0xff] %vm683, %v679
          %689 = vst.msk [vmem:[#allocation2 + $0x28] sm:$0xff] %vm683, %v680
          %690 = vst.msk [vmem:[#allocation2 + $0x30] sm:$0xff] %vm683, %v681
          %691 = vst.msk [vmem:[#allocation2 + $0x38] sm:$0xff] %vm683, %v682
        $region40: #{multi_fawmf_forward_batched.1} parent=35 // pred_fallthru
          _
        %v692 = vld [vmem:[%s184] sm:$0xff]
        %v693 = vld [vmem:[%s184 + $0x8] sm:$0xff]
        %v694 = vld [vmem:[%s184 + $0x10] sm:$0xff]
        %v695 = vld [vmem:[%s184 + $0x18] sm:$0xff]
        %v696 = vld [vmem:[%s184 + $0x20] sm:$0xff]
        %v697 = vld [vmem:[%s184 + $0x28] sm:$0xff]
        %v698 = vld [vmem:[#allocation2] sm:$0xff]
        %v699 = vld [vmem:[#allocation2 + $0x8] sm:$0xff]
        %v700 = vld [vmem:[#allocation2 + $0x10] sm:$0xff]
        %v701 = vld [vmem:[#allocation2 + $0x18] sm:$0xff]
        %v702 = vld [vmem:[#allocation2 + $0x20] sm:$0xff]
        %v703 = vld [vmem:[#allocation2 + $0x28] sm:$0xff]
        %v704 = vld [vmem:[#allocation2 + $0x30] sm:$0xff]
        %v705 = vld [vmem:[#allocation2 + $0x38] sm:$0xff]
        %vm706 = vcmask 523264
        %v708 = vsel %vm706, %v692, 0
        %v711 = vsel %vm706, %v693, 0
        %v714 = vsel %vm706, %v694, 0
        %v717 = vsel %vm706, %v695, 0
        %v720 = vsel %vm706, %v696, 0
        %v723 = vsel %vm706, %v697, 0
        %725 = vmatprep.subr.mxu0 0.0
        %726 = vmatpush1.msra.mxu0 0.0
        %727 = vmatprep.subr.mxu0 0.0
        %728 = vmatpush1.msra.mxu0 0.0
        %729 = vmatprep.subr.mxu0 0.0
        %730 = vmatpush1.msra.mxu0 0.0
        %731 = vmatprep.subr.mxu0 0.0
        %732 = vmatpush1.msra.mxu0 0.0
        %733 = vmatprep.subr.mxu0 0.0
        %734 = vmatpush1.msra.mxu0 0.0
        %735 = vmatprep.subr.mxu0 0.0
        %736 = vmatpush1.msra.mxu0 0.0
        %737 = vmatprep.subr.mxu0 0.0
        %738 = vmatpush1.msra.mxu0 0.0
        %739 = vmatprep.subr.mxu0 0.0
        %740 = vmatpush1.msra.mxu0 0.0
        %741 = vmatprep.subr.mxu0 0.0
        %742 = vmatpush1.msra.mxu0 %v705
        %743 = vmatprep.subr.mxu0 0.0
        %744 = vmatpush1.msra.mxu0 %v704
        %745 = vmatprep.subr.mxu0 0.0
        %746 = vmatpush1.msra.mxu0 %v703
        %747 = vmatprep.subr.mxu0 0.0
        %748 = vmatpush1.msra.mxu0 %v702
        %749 = vmatprep.subr.mxu0 0.0
        %750 = vmatpush1.msra.mxu0 %v701
        %751 = vmatprep.subr.mxu0 0.0
        %752 = vmatpush1.msra.mxu0 %v700
        %753 = vmatprep.subr.mxu0 0.0
        %754 = vmatpush1.msra.mxu0 %v699
        %755 = vmatprep.subr.mxu0 0.0
        %756 = vmatpush1.msra.mxu0 %v698
        %757 = vmatprep.subr.mxu0 0.0
        %758 = vmatpush2.msra.mxu0 0.0
        %759 = vmatprep.subr.mxu0 0.0
        %760 = vmatpush2.msra.mxu0 0.0
        %761 = vmatprep.subr.mxu0 0.0
        %762 = vmatpush2.msra.mxu0 0.0
        %763 = vmatprep.subr.mxu0 0.0
        %764 = vmatpush2.msra.mxu0 0.0
        %765 = vmatprep.subr.mxu0 0.0
        %766 = vmatpush2.msra.mxu0 0.0
        %767 = vmatprep.subr.mxu0 0.0
        %768 = vmatpush2.msra.mxu0 0.0
        %769 = vmatprep.subr.mxu0 0.0
        %770 = vmatpush2.msra.mxu0 0.0
        %771 = vmatprep.subr.mxu0 0.0
        %772 = vmatpush2.msra.mxu0 0.0
        %773 = vmatprep.subr.mxu0 0.0
        %774 = vmatpush2.msra.mxu0 0.0
        %775 = vmatprep.subr.mxu0 0.0
        %776 = vmatpush2.msra.mxu0 0.0
        %777 = vmatprep.subr.mxu0 0.0
        %778 = vmatpush2.msra.mxu0 0.0
        %779 = vmatprep.subr.mxu0 0.0
        %780 = vmatpush2.msra.mxu0 0.0
        %781 = vmatprep.subr.mxu0 0.0
        %782 = vmatpush2.msra.mxu0 0.0
        %783 = vmatprep.subr.mxu0 0.0
        %784 = vmatpush2.msra.mxu0 0.0
        %785 = vmatprep.subr.mxu0 0.0
        %786 = vmatpush2.msra.mxu0 0.0
        %787 = vmatprep.subr.mxu0 0.0
        %788 = vmatpush2.msra.mxu0 0.0
        %789 = vmatprep.mubr.f32.mxu0 0.0
        %790 = vmatmul.mubr.f32.gmra.mxu0 %v708
        %v791 = vpop.f32.mrf.mxu0
        %v792 = vadd.f32 0.0, %v791
        %v793 = vpop.f32.mrf.mxu0
        %794 = vmatprep.mubr.f32.mxu0 0.0
        %795 = vmatmul.mubr.f32.gmra.mxu0 %v711
        %v796 = vpop.f32.mrf.mxu0
        %v797 = vadd.f32 0.0, %v796
        %v798 = vpop.f32.mrf.mxu0
        %799 = vmatprep.mubr.f32.mxu0 0.0
        %800 = vmatmul.mubr.f32.gmra.mxu0 %v714
        %v801 = vpop.f32.mrf.mxu0
        %v802 = vadd.f32 0.0, %v801
        %v803 = vpop.f32.mrf.mxu0
        %804 = vmatprep.mubr.f32.mxu0 0.0
        %805 = vmatmul.mubr.f32.gmra.mxu0 %v717
        %v806 = vpop.f32.mrf.mxu0
        %v807 = vadd.f32 0.0, %v806
        %v808 = vpop.f32.mrf.mxu0
        %809 = vmatprep.mubr.f32.mxu0 0.0
        %810 = vmatmul.mubr.f32.gmra.mxu0 %v720
        %v811 = vpop.f32.mrf.mxu0
        %v812 = vadd.f32 0.0, %v811
        %v813 = vpop.f32.mrf.mxu0
        %814 = vmatprep.mubr.f32.mxu0 0.0
        %815 = vmatmul.mubr.f32.gmra.mxu0 %v723
        %v816 = vpop.f32.mrf.mxu0
        %v817 = vadd.f32 0.0, %v816
        %v818 = vpop.f32.mrf.mxu0
        %819 = vdwg.mxu0
        %v820 = vmul.f32 %v792, %v792
        %v821 = vmul.f32 %v797, %v797
        %v822 = vmul.f32 %v802, %v802
        %v823 = vmul.f32 %v807, %v807
        %vm824 = vcmask 130048
        %v825 = vsel %vm824, %v820, 0.0
        %v826 = vsel %vm824, %v821, 0.0
        %v827 = vadd.f32 %v825, %v826
        %v828 = vsel %vm824, %v822, 0.0
        %v829 = vadd.f32 %v827, %v828
        %v830 = vsel %vm824, %v823, 0.0
        %v831 = vadd.f32 %v829, %v830
        %832 = vadd.xlane.f32.xlu0 %v831
        %v833 = vpop.xlane.xlu0 %832
        %v834 = vrot.slane %v833, 4
        %v835 = vadd.f32 %v833, %v834
        %v836 = vrot.slane %v835, 2
        %v837 = vadd.f32 %v835, %v836
        %v838 = vrot.slane %v837, 1
        %v839 = vadd.f32 %v837, %v838
        %s840 = vtos %v839
        %s841 = smul.f32 %s840, 0.5
        %v842 = vrcp.pop 8.0
        %s843 = vtos %v842
        %s844 = smul.f32 %s841, %s843
        %v845 = vld [vmem:[%s2] sm:$0xff]
        %v846 = vld [vmem:[%s2 + $0x8] sm:$0xff]
        %v847 = vld [vmem:[%s2 + $0x10] sm:$0xff]
        %v848 = vld [vmem:[%s2 + $0x18] sm:$0xff]
        %v849 = vld [vmem:[%s2 + $0x20] sm:$0xff]
        %v850 = vld [vmem:[%s2 + $0x28] sm:$0xff]
        %v851 = vld [vmem:[%s2 + $0x30] sm:$0xff]
        %v852 = vld [vmem:[%s2 + $0x38] sm:$0xff]
        %v853 = vlaneseq
        %v854 = vshrl.u32 %v853, 7
        %v855 = vadd.s32 %v854, 8
        %v856 = vadd.s32 %v854, 16
        %v857 = vadd.s32 %v854, 24
        %v858 = vadd.s32 %v854, 32
        %v859 = vadd.s32 %v854, 40
        %v860 = vadd.s32 %v854, 48
        %v861 = vadd.s32 %v854, 56
        %vm862 = vcmp.lt.s32.totalorder %v854, 24
        %vm863 = vcmp.lt.s32.totalorder %v855, 24
        %vm864 = vcmp.lt.s32.totalorder %v856, 24
        %vm865 = vcmp.lt.s32.totalorder %v857, 24
        %vm866 = vcmp.lt.s32.totalorder %v858, 24
        %vm867 = vcmp.lt.s32.totalorder %v859, 24
        %vm868 = vcmp.lt.s32.totalorder %v860, 24
        %vm869 = vcmp.lt.s32.totalorder %v861, 24
        %v870 = vsel %vm862, 0.041666668, 0.025
        %v871 = vsel %vm863, 0.041666668, 0.025
        %v872 = vsel %vm864, 0.041666668, 0.025
        %v873 = vsel %vm865, 0.041666668, 0.025
        %v874 = vsel %vm866, 0.041666668, 0.025
        %v875 = vsel %vm867, 0.041666668, 0.025
        %v876 = vsel %vm868, 0.041666668, 0.025
        %v877 = vsel %vm869, 0.041666668, 0.025
        %v878 = vmul.f32 %v870, %v845
        %v879 = vmul.f32 %v871, %v846
        %v880 = vmul.f32 %v872, %v847
        %v881 = vmul.f32 %v873, %v848
        %v882 = vmul.f32 %v874, %v849
        %v883 = vmul.f32 %v875, %v850
        %v884 = vmul.f32 %v876, %v851
        %v885 = vmul.f32 %v877, %v852
        %v886 = vmul.f32 %v878, %v845
        %v887 = vmul.f32 %v879, %v846
        %v888 = vmul.f32 %v880, %v847
        %v889 = vmul.f32 %v881, %v848
        %v890 = vmul.f32 %v882, %v849
        %v891 = vmul.f32 %v883, %v850
        %v892 = vmul.f32 %v884, %v851
        %v893 = vmul.f32 %v885, %v852
        %vm894 = vcmask 64512
        %v895 = vsel %vm894, %v886, 0.0
        %v896 = vsel %vm894, %v887, 0.0
        %v897 = vadd.f32 %v895, %v896
        %v898 = vsel %vm894, %v888, 0.0
        %v899 = vadd.f32 %v897, %v898
        %v900 = vsel %vm894, %v889, 0.0
        %v901 = vadd.f32 %v899, %v900
        %v902 = vsel %vm894, %v890, 0.0
        %v903 = vadd.f32 %v901, %v902
        %v904 = vsel %vm894, %v891, 0.0
        %v905 = vadd.f32 %v903, %v904
        %v906 = vsel %vm894, %v892, 0.0
        %v907 = vadd.f32 %v905, %v906
        %v908 = vsel %vm894, %v893, 0.0
        %v909 = vadd.f32 %v907, %v908
        %910 = vadd.xlane.f32.xlu0 %v909
        %v911 = vpop.xlane.xlu0 %910
        %v912 = vrot.slane %v911, 4
        %v913 = vadd.f32 %v911, %v912
        %v914 = vrot.slane %v913, 2
        %v915 = vadd.f32 %v913, %v914
        %v916 = vrot.slane %v915, 1
        %v917 = vadd.f32 %v915, %v916
        %s918 = vtos %v917
        %s919 = smul.f32 %s918, 0.5
        %s920 = sadd.f32 %s844, %s919
        %s921 = smul.f32 %s920, 0.0001
        %v922 = vmul.f32 %v792, %v797
        %v923 = vmul.f32 %v792, %v802
        %v924 = vmul.f32 %v792, %v807
        %v925 = vsel %vm824, %v922, 0.0
        %926 = vadd.xlane.f32.xlu0 %v925
        %v927 = vpop.xlane.xlu0 %926
        %v928 = vsel %vm824, %v923, 0.0
        %929 = vadd.xlane.f32.xlu0 %v928
        %v930 = vpop.xlane.xlu0 %929
        %v931 = vsel %vm824, %v924, 0.0
        %932 = vadd.xlane.f32.xlu0 %v931
        %v933 = vpop.xlane.xlu0 %932
        %937 = vrot.lane.b32.xlu0 %v922, 104
        %v938 = vpop.permute.xlu0 %937
        %939 = vrot.lane.b32.xlu0 %v923, 104
        %v940 = vpop.permute.xlu0 %939
        %941 = vrot.lane.b32.xlu0 %v924, 104
        %v942 = vpop.permute.xlu0 %941
        %v946 = vsel %vm894, %v938, 0.0
        %947 = vadd.xlane.f32.xlu0 %v946
        %v948 = vpop.xlane.xlu0 %947
        %v949 = vsel %vm894, %v940, 0.0
        %950 = vadd.xlane.f32.xlu0 %v949
        %v951 = vpop.xlane.xlu0 %950
        %v952 = vsel %vm894, %v942, 0.0
        %953 = vadd.xlane.f32.xlu0 %v952
        %v954 = vpop.xlane.xlu0 %953
        %v955 = vmul.f32 %v812, %v812
        %v956 = vmul.f32 %v817, %v817
        %961 = vrot.lane.b32.xlu0 %v820, 112
        %v962 = vpop.permute.xlu0 %961
        %963 = vrot.lane.b32.xlu0 %v821, 112
        %v964 = vpop.permute.xlu0 %963
        %965 = vrot.lane.b32.xlu0 %v955, 112
        %v966 = vpop.permute.xlu0 %965
        %967 = vrot.lane.b32.xlu0 %v956, 112
        %v968 = vpop.permute.xlu0 %967
        %v973 = vsel %vm894, %v962, 0.0
        %974 = vadd.xlane.f32.xlu0 %v973
        %v975 = vpop.xlane.xlu0 %974
        %v976 = vsel %vm894, %v964, 0.0
        %977 = vadd.xlane.f32.xlu0 %v976
        %v978 = vpop.xlane.xlu0 %977
        %v979 = vsel %vm894, %v966, 0.0
        %980 = vadd.xlane.f32.xlu0 %v979
        %v981 = vpop.xlane.xlu0 %980
        %v982 = vsel %vm894, %v968, 0.0
        %983 = vadd.xlane.f32.xlu0 %v982
        %v984 = vpop.xlane.xlu0 %983
        %v985 = vmax.f32 %v975, 1e-24
        %v986 = vmax.f32 %v978, 1e-24
        %v987 = vmax.f32 %v981, 1e-24
        %v988 = vmax.f32 %v984, 1e-24
        %v989 = vrsqrt.pop %v985
        %v990 = vrsqrt.pop %v986
        %v991 = vrsqrt.pop %v987
        %v992 = vrsqrt.pop %v988
        %v993 = vmul.f32 %v792, %v989
        %v994 = vmul.f32 %v797, %v990
        %v995 = vmul.f32 %v812, %v991
        %v996 = vmul.f32 %v817, %v992
        %v997 = vsub.f32 %v993, %v994
        %v998 = vsub.f32 %v993, %v995
        %v999 = vsub.f32 %v993, %v996
        %v1000 = vadd.f32 %v997, 1e-06
        %v1001 = vadd.f32 %v998, 1e-06
        %v1002 = vadd.f32 %v999, 1e-06
        %v1003 = vmul.f32 %v1000, %v1000
        %v1004 = vmul.f32 %v1001, %v1001
        %v1005 = vmul.f32 %v1002, %v1002
        %1009 = vrot.lane.b32.xlu0 %v1003, 112
        %v1010 = vpop.permute.xlu0 %1009
        %1011 = vrot.lane.b32.xlu0 %v1004, 112
        %v1012 = vpop.permute.xlu0 %1011
        %1013 = vrot.lane.b32.xlu0 %v1005, 112
        %v1014 = vpop.permute.xlu0 %1013
        %v1018 = vsel %vm894, %v1010, 0.0
        %1019 = vadd.xlane.f32.xlu0 %v1018
        %v1020 = vpop.xlane.xlu0 %1019
        %v1021 = vsel %vm894, %v1012, 0.0
        %1022 = vadd.xlane.f32.xlu0 %v1021
        %v1023 = vpop.xlane.xlu0 %1022
        %v1024 = vsel %vm894, %v1014, 0.0
        %1025 = vadd.xlane.f32.xlu0 %v1024
        %v1026 = vpop.xlane.xlu0 %1025
        %v1027 = vrsqrt.pop %v1020
        %v1028 = vmul.f32 %v1020, %v1027
        %vm1029 = vcmp.eq.f32.partialorder %v1020, inf
        %v1030 = vsel %vm1029, %v1020, %v1028
        %vm1031 = vcmp.eq.f32.partialorder %v1020, 0.0
        %v1032 = vand.u32 %v1020, 2147483648
        %v1033 = vsel %vm1031, %v1032, %v1030
        %v1034 = vrsqrt.pop %v1023
        %v1035 = vmul.f32 %v1023, %v1034
        %vm1036 = vcmp.eq.f32.partialorder %v1023, inf
        %v1037 = vsel %vm1036, %v1023, %v1035
        %vm1038 = vcmp.eq.f32.partialorder %v1023, 0.0
        %v1039 = vand.u32 %v1023, 2147483648
        %v1040 = vsel %vm1038, %v1039, %v1037
        %v1041 = vrsqrt.pop %v1026
        %v1042 = vmul.f32 %v1026, %v1041
        %vm1043 = vcmp.eq.f32.partialorder %v1026, inf
        %v1044 = vsel %vm1043, %v1026, %v1042
        %vm1045 = vcmp.eq.f32.partialorder %v1026, 0.0
        %v1046 = vand.u32 %v1026, 2147483648
        %v1047 = vsel %vm1045, %v1046, %v1044
        %v1048 = vsub.f32 2.0, %v1033
        %v1049 = vsub.f32 2.0, %v1040
        %v1050 = vsub.f32 2.0, %v1047
        %v1051 = vmul.f32 %v1048, 0.5
        %v1052 = vmul.f32 %v1049, 0.5
        %v1053 = vmul.f32 %v1050, 0.5
        %v1054 = vsub.f32 0.0, %v951
        %v1055 = vsub.f32 0.0, %v954
        %v1056 = vmul.f32 %v1054, 1.442695
        %v1057 = vpow.pop %v1056
        %v1058 = vmul.f32 %v1055, 1.442695
        %v1059 = vpow.pop %v1058
        %v1060 = vadd.f32 %v1057, 1.0
        %v1061 = vadd.f32 %v1059, 1.0
        %v1062 = vrcp.pop %v1060
        %v1063 = vmul.f32 1.0, %v1062
        %v1064 = vrcp.pop %v1061
        %v1065 = vmul.f32 1.0, %v1064
        %v1066 = vadd.f32 %v1063, %v1052
        %v1067 = vmul.f32 %v1066, 0.5
        %v1068 = vadd.f32 %v1065, %v1053
        %v1069 = vmul.f32 %v1068, 0.5
        %v1070 = vadd.f32 %v1067, %v1069
        %v1071 = vrcp.pop %v1070
        %v1072 = vmul.f32 %v1067, %v1071
        %v1073 = vmul.f32 %v1072, %v930
        %v1074 = vmul.f32 %v1069, %v1071
        %v1075 = vmul.f32 %v1074, %v933
        %v1076 = vadd.f32 %v1073, %v1075
        %v1077 = vsub.f32 %v1052, %v1053
        %v1078 = vsub.f32 %v1051, %v1052
        %v1079 = vsub.f32 %v927, %v1076
        %1081 = vrot.lane.b32.xlu0 %v1079, 3
        %v1082 = vpop.permute.xlu0 %1081
        %vm1084 = vcmask 7168
        %v1085 = vsel %vm1084, %v948, %v1077
        %vm1086 = vcmask 15360
        %v1087 = vsel %vm1086, %v1085, %v1078
        %vm1088 = vcmask 23552
        %v1089 = vsel %vm1088, %v1087, %v1082
        %v1090 = vsub.f32 0.0, %v1089
        %v1091 = vmax.f32 %v1090, 0.0
        %v1092 = vand.u32 2147483647, %v1089
        %v1093 = vsub.f32 0.0, %v1092
        %v1094 = vmul.f32 %v1093, 1.442695
        %v1095 = vpow.pop %v1094
        %v1096 = vadd.f32 %v1095, 1.0
        %v1097 = vlog2.pop %v1096
        %v1098 = vmul.f32 %v1097, 0.6931472
        %v1099 = vadd.f32 %v1091, %v1098
        %v1100 = vlaneseq
        %v1101 = vand.u32 %v1100, 127
        %vm1102 = vcmp.eq.s32.totalorder %v1101, 3
        %vm1103 = vcmp.eq.s32.totalorder %v1101, 0
        %v1104 = vsel %vm1103, 0.01, 0.005
        %v1105 = vsel %vm1102, 1.0, %v1104
        %v1106 = vmul.f32 %v1105, 0.125
        %v1107 = vmul.f32 %v1099, %v1106
        %vm1108 = vcmask 31744
        %v1109 = vsel %vm1108, %v1107, 0.0
        %1110 = vadd.xlane.f32.xlu0 %v1109
        %v1111 = vpop.xlane.xlu0 %1110
        %v1112 = vrot.slane %v1111, 4
        %v1113 = vadd.f32 %v1111, %v1112
        %v1114 = vrot.slane %v1113, 2
        %v1115 = vadd.f32 %v1113, %v1114
        %v1116 = vrot.slane %v1115, 1
        %v1117 = vadd.f32 %v1115, %v1116
        %s1118 = vtos %v1117
        %s1119 = sadd.f32 %s1118, %s921
        %s1120 = smul.u32 %s16, 128
        %s1121 = scalar_lea.smem [#allocation3], %s1120
        %1122 = sst [smem:[%s1121]] %s1119
        // Predicated region
        $region41: #{multi_fawmf_forward_batched.1} parent=35 // pred_check
          %p1123 = pneg %p118
        $region42: #{multi_fawmf_forward_batched.1} parent=35 // pred_check_branch
          %1125 = sbr.rel (%p1123) target = $region44
        $region43: #{multi_fawmf_forward_batched.1} parent=35 // pred_region
          %s1127 = ssub.s32 64, 64
          %1128 = vsyncadd [#allocation4], %s1127
          %s1130 = sshll.u32 %s4, 4
          %s1131 = int_to_ptr.vmem [resolvable:$true] %s1130
          %1133 = dma.smem_to_vmem [#allocation3], 64, %s1131, [#allocation4]
        $region44: #{multi_fawmf_forward_batched.1} parent=35 // pred_fallthru
          _
        // Predicated region
        $region45: #{multi_fawmf_forward_batched.1} parent=35 // pred_check
          %p1134 = pneg %p118
        $region46: #{multi_fawmf_forward_batched.1} parent=35 // pred_check_branch
          %1136 = sbr.rel (%p1134) target = $region48
        $region47: #{multi_fawmf_forward_batched.1} parent=35 // pred_region
          %1137 = dma.done [#allocation4], 64
        $region48: #{multi_fawmf_forward_batched.1} parent=35 // pred_fallthru
          _
        %1138 = sfence
      $region36: #{multi_fawmf_forward_batched.1} parent=5 // pred_fallthru
        _
      %p1139 = scmp.le.s32.totalorder 2, %s11
      // Predicated region
      $region49: #{multi_fawmf_forward_batched.1} parent=5 // pred_check
        %p1140 = pneg %p1139
      $region50: #{multi_fawmf_forward_batched.1} parent=5 // pred_check_branch
        %1142 = sbr.rel (%p1140) target = $region52
      $region51: #{multi_fawmf_forward_batched.1} parent=5 // pred_region
        %s1143 = ssub.s32 %s11, 2
      $region52: #{multi_fawmf_forward_batched.1} parent=5 // pred_fallthru
        _
    $region6: #{multi_fawmf_forward_batched.1} parent=1 // loop_footer
      %s15 = sadd.s32 1, %s11
    $region7: #{multi_fawmf_forward_batched.1} parent=1 // loop_footer_branch
      %10 = sbr.rel target = $region3
    $region8: #{multi_fawmf_forward_batched.1} parent=1 // loop_exit
      _
    %1144 = vsyncpa [#allocation4], 1
    %s1145 = scalar_lea.sflag [#allocation4], 1
    %1146 = vsyncpa %s1145, 1

</llo_original>
